<compile_context>
chip_gen: v7x
topology: tpu7x:2x2x1
jax: 0.10.0
libtpu: 0.0.40
codegen_flags: <defaults>
</compile_context>

<pallas_src>
import numpy as np
import jax
import jax.numpy as jnp
from jax.experimental import pallas as pl
from jax.experimental.pallas import tpu as pltpu


NUM_SPLITS = 2      # leading "parallel" grid axis (both TensorCores on v7x)
SUBLANES = 8        # vreg sublane count


def build_laplacian(faces: np.ndarray, nv: int) -> np.ndarray:
    """Deterministic re-implementation of LaplacianLoss.__init__ buffer (host-side)."""
    laplacian = np.zeros([nv, nv], dtype=np.float32)
    laplacian[faces[:, 0], faces[:, 1]] = -1
    laplacian[faces[:, 1], faces[:, 0]] = -1
    laplacian[faces[:, 1], faces[:, 2]] = -1
    laplacian[faces[:, 2], faces[:, 1]] = -1
    laplacian[faces[:, 2], faces[:, 0]] = -1
    laplacian[faces[:, 0], faces[:, 2]] = -1
    r, c = np.diag_indices(nv)
    laplacian[r, c] = -laplacian.sum(1)
    for i in range(nv):
        laplacian[i, :] /= laplacian[i, i] + 1e-08
    return laplacian


def _round_up(n: int, m: int) -> int:
    return ((n + m - 1) // m) * m


def prepare_laplacian(laplacian, row_tile: int = 512, num_splits: int = NUM_SPLITS,
                      dtype=jnp.float32) -> jax.Array:
    """Pad L once at init to a multiple of num_splits*row_tile and cast.

    Zero rows/cols contribute nothing to the sum of squares, so padding is
    loss-preserving.  Doing this per call costs ~2x the kernel's HBM traffic
    for the real NV=6890 buffer, hence the one-time host-side pad here.
    """
    lap_np = np.asarray(laplacian, dtype=np.float32)
    nv = lap_np.shape[0]
    assert lap_np.shape == (nv, nv)
    nvp = _round_up(nv, num_splits * row_tile)
    if nvp != nv:
        padded = np.zeros((nvp, nvp), dtype=np.float32)
        padded[:nv, :nv] = lap_np
    else:
        padded = lap_np
    return jnp.asarray(padded, dtype=dtype)


def _laplacian_loss_kernel(l_ref, x_ref, o_ref, acc_ref):
    # grid = (core split [parallel], L row tiles [arbitrary = reduction]).
    m = pl.program_id(1)

    @pl.when(m == 0)
    def _init():
        acc_ref[...] = jnp.zeros_like(acc_ref)

    # MXU matmul: [TM, NVp] @ [NVp, Wp] -> [TM, Wp], f32 accumulation regardless
    # of the (possibly bf16) input dtype.  All batch elements / xyz coords live
    # in the Wp lanes; zero-padded lanes and zero-padded L rows contribute 0.
    y = jnp.dot(l_ref[...], x_ref[...], preferred_element_type=jnp.float32)
    yy = y * y
    # Vreg-shaped partial sums: pure VPU adds, no per-step cross-lane XLU
    # reduction or scalar loop-carry.  Scalar collapse is deferred to the host.
    acc_ref[...] += yy.reshape(-1, SUBLANES, yy.shape[-1]).sum(axis=0)

    @pl.when(m == pl.num_programs(1) - 1)
    def _finalize():
        o_ref[...] = acc_ref[...][None]


def laplacian_loss(lap_padded: jax.Array, x: jax.Array, average: bool = False,
                   row_tile: int = 512, num_splits: int = NUM_SPLITS):
    """loss = mean_{b,v}( sum_c (L @ x_b)^2 )  (or sum/B if average=True).

    `lap_padded` must come from prepare_laplacian(..., row_tile, num_splits).
    """
    B, NV, C = x.shape
    NVp = lap_padded.shape[0]
    assert lap_padded.shape == (NVp, NVp)
    assert row_tile % 128 == 0
    assert NVp >= NV and NVp % (num_splits * row_tile) == 0, (
        "pass prepare_laplacian(...) output built with matching row_tile/num_splits")

    # Pack batch + coords into the lane dimension: x_packed[v, b*C + c] = x[b, v, c],
    # so the big L matrix is streamed from HBM once for the whole batch.
    W = B * C
    Wp = _round_up(max(W, 128), 128)
    x_packed = jnp.transpose(x, (1, 0, 2)).reshape(NV, W)
    x_p = jnp.zeros((NVp, Wp), lap_padded.dtype).at[:NV, :W].set(
        x_packed.astype(lap_padded.dtype))

    num_m = NVp // (num_splits * row_tile)
    itemsize = jnp.dtype(lap_padded.dtype).itemsize

    # VMEM footprint: double-buffered L row tile + double-buffered packed x +
    # vreg accumulator + headroom.  Derived from the footprint instead of
    # requesting 64 MiB (= all of v7x's per-TC VMEM).
    vmem_limit = int(2 * row_tile * NVp * itemsize      # L tile, double-buffered
                     + 2 * NVp * Wp * itemsize          # packed x, double-buffered
                     + 4 * SUBLANES * Wp * 4            # acc scratch + out block
                     + (8 << 20))                       # headroom
    vmem_limit = min(vmem_limit, 100 << 20)

    cost = pl.CostEstimate(
        flops=2 * NVp * NVp * Wp,
        transcendentals=0,
        bytes_accessed=NVp * NVp * itemsize + NVp * Wp * itemsize
                       + num_splits * SUBLANES * Wp * 4,
    )

    partials = pl.pallas_call(
        _laplacian_loss_kernel,
        out_shape=jax.ShapeDtypeStruct((num_splits, SUBLANES, Wp), jnp.float32),
        grid_spec=pltpu.PrefetchScalarGridSpec(
            num_scalar_prefetch=0,
            grid=(num_splits, num_m),
            in_specs=[
                # L row tile (row_tile, full K): streamed once, double-buffered.
                pl.BlockSpec((row_tile, NVp), lambda c, m, n=num_m: (c * n + m, 0)),
                # Packed x: small, constant index -> resident across row tiles.
                pl.BlockSpec((NVp, Wp), lambda c, m: (0, 0)),
            ],
            out_specs=pl.BlockSpec((1, SUBLANES, Wp), lambda c, m: (c, 0, 0)),
            scratch_shapes=[pltpu.VMEM((SUBLANES, Wp), jnp.float32)],
        ),
        compiler_params=pltpu.CompilerParams(
            dimension_semantics=("parallel", "arbitrary"),
            vmem_limit_bytes=vmem_limit,
        ),
        cost_estimate=cost,
    )(lap_padded, x_p)

    total = jnp.sum(partials)      # tiny (num_splits*8*Wp) reduction in XLA
    if average:
        return total / B           # x.sum() / batch_size
    else:
        return total / (B * NV)    # x.mean() over the real [B, NV] (pad rows add 0)


if __name__ == "__main__":
    # Small deterministic problem (module hard-codes nv=6890; we scale the vertex
    # count down but keep the exact buffer construction and forward math).
    # NV=300 deliberately exercises the padding path (NVp=1024, Wp=128).
    NV, NF, B = 300, 600, 4
    ROW_TILE = 512

    key = jax.random.PRNGKey(0)
    kf, kx = jax.random.split(key)
    faces = np.asarray(jax.random.randint(kf, (NF, 3), 0, NV))
    lap_np = build_laplacian(faces, NV)
    x = jax.random.normal(kx, (B, NV, 3), dtype=jnp.float32)

    # Pure-JAX reference (f32).
    y_ref = jnp.einsum("vw,bwc->bvc", jnp.asarray(lap_np), x)
    per_vertex = jnp.sum(y_ref ** 2, axis=2)
    ref_mean = jnp.mean(per_vertex)
    ref_avg = jnp.sum(per_vertex) / B

    # f32 mode: bit-parity with the PyTorch module.
    lap_f32 = prepare_laplacian(lap_np, row_tile=ROW_TILE, dtype=jnp.float32)
    out_mean = jax.block_until_ready(
        laplacian_loss(lap_f32, x, average=False, row_tile=ROW_TILE))
    out_avg = jax.block_until_ready(
        laplacian_loss(lap_f32, x, average=True, row_tile=ROW_TILE))
    assert jnp.allclose(out_mean, ref_mean, rtol=1e-4, atol=1e-4), (out_mean, ref_mean)
    assert jnp.allclose(out_avg, ref_avg, rtol=1e-4, atol=1e-4), (out_avg, ref_avg)

    # bf16 stream mode: halves the HBM traffic of L (f32 accumulation kept);
    # numerics loosen to ~1e-2 relative as documented in the perf review.
    lap_bf16 = prepare_laplacian(lap_np, row_tile=ROW_TILE, dtype=jnp.bfloat16)
    out_mean_bf16 = jax.block_until_ready(
        laplacian_loss(lap_bf16, x, average=False, row_tile=ROW_TILE))
    assert jnp.allclose(out_mean_bf16, ref_mean, rtol=5e-2, atol=5e-2), (
        out_mean_bf16, ref_mean)

    print("KERNEL_OK")
</pallas_src>

<mosaic_0001>
module attributes {stable_mosaic.version = 11 : i64} {
  func.func @_laplacian_loss_kernel(%arg0: i32, %arg1: i32, %arg2: memref<512x1024xf32, #tpu.memory_space<vmem>>, %arg3: memref<1024x128xf32, #tpu.memory_space<vmem>>, %arg4: memref<1x8x128xf32, #tpu.memory_space<vmem>>, %arg5: memref<8x128xf32, #tpu.memory_space<vmem>>) attributes {dimension_semantics = [#tpu.dimension_semantics<parallel>, #tpu.dimension_semantics<arbitrary>], iteration_bounds = array<i64: 2, 1>, scalar_prefetch = 0 : i64, scratch_operands = 1 : i64, tpu.core_type = #tpu.core_type<tc>, window_params = [{transform_indices = @transform_0, window_bounds = array<i64: 512, 1024>}, {pipeline_mode = #tpu.pipeline_mode<synchronous>, transform_indices = @transform_1, window_bounds = array<i64: 1024, 128>}, {transform_indices = @transform_2, window_bounds = array<i64: 1, 8, 128>}]} {
    %c0_i32 = arith.constant 0 : i32
    %0 = arith.cmpi eq, %arg1, %c0_i32 : i32
    %1 = arith.extui %0 : i1 to i32
    %c0_i32_0 = arith.constant 0 : i32
    %2 = arith.cmpi ne, %1, %c0_i32_0 : i32
    scf.if %2 {
      %cst_11 = arith.constant 0.000000e+00 : f32
      %15 = vector.broadcast %cst_11 : f32 to vector<8x128xf32>
      %c0_12 = arith.constant 0 : index
      %c0_13 = arith.constant 0 : index
      %16 = vector.load %arg5[%c0_12, %c0_13] : memref<8x128xf32, #tpu.memory_space<vmem>>, vector<8x128xf32>
      tpu.vector_store %arg5[%c0_12, %c0_13], %15 {strides = array<i32>} : memref<8x128xf32, #tpu.memory_space<vmem>>, vector<8x128xf32>,
    } else {
    }
    %c0 = arith.constant 0 : index
    %c0_1 = arith.constant 0 : index
    %3 = vector.load %arg2[%c0, %c0_1] : memref<512x1024xf32, #tpu.memory_space<vmem>>, vector<512x1024xf32>
    %c0_2 = arith.constant 0 : index
    %c0_3 = arith.constant 0 : index
    %4 = vector.load %arg3[%c0_2, %c0_3] : memref<1024x128xf32, #tpu.memory_space<vmem>>, vector<1024x128xf32>
    %cst = arith.constant dense<0.000000e+00> : vector<512x128xf32>
    %5 = tpu.matmul %3, %4, %cst {dimension_numbers = #tpu.dot_dimension_numbers<[1], [0], [0], [1], [0, 0, 1, 1], [], []>} : vector<512x1024xf32>, vector<1024x128xf32>, vector<512x128xf32> -> vector<512x128xf32>
    %6 = arith.mulf %5, %5 : vector<512x128xf32>
    %c0_4 = arith.constant 0 : index
    %c0_5 = arith.constant 0 : index
    %7 = vector.load %arg5[%c0_4, %c0_5] : memref<8x128xf32, #tpu.memory_space<vmem>>, vector<8x128xf32>
    %8 = vector.shape_cast %6 : vector<512x128xf32> to vector<64x8x128xf32>
    %cst_6 = arith.constant dense<0.000000e+00> : vector<8x128xf32>
    %9 = vector.multi_reduction <add>, %8, %cst_6 [0] : vector<64x8x128xf32> to vector<8x128xf32>
    %10 = arith.addf %7, %9 : vector<8x128xf32>
    %c0_7 = arith.constant 0 : index
    %c0_8 = arith.constant 0 : index
    %11 = vector.load %arg5[%c0_7, %c0_8] : memref<8x128xf32, #tpu.memory_space<vmem>>, vector<8x128xf32>
    tpu.vector_store %arg5[%c0_7, %c0_8], %10 {strides = array<i32>} : memref<8x128xf32, #tpu.memory_space<vmem>>, vector<8x128xf32>,
    %c0_i32_9 = arith.constant 0 : i32
    %12 = arith.cmpi eq, %arg1, %c0_i32_9 : i32
    %13 = arith.extui %12 : i1 to i32
    %c0_i32_10 = arith.constant 0 : i32
    %14 = arith.cmpi ne, %13, %c0_i32_10 : i32
    scf.if %14 {
      %c0_11 = arith.constant 0 : index
      %c0_12 = arith.constant 0 : index
      %15 = vector.load %arg5[%c0_11, %c0_12] : memref<8x128xf32, #tpu.memory_space<vmem>>, vector<8x128xf32>
      %16 = vector.shape_cast %15 : vector<8x128xf32> to vector<1x8x128xf32>
      %c0_13 = arith.constant 0 : index
      %c0_14 = arith.constant 0 : index
      %c0_15 = arith.constant 0 : index
      %17 = vector.load %arg4[%c0_13, %c0_14, %c0_15] : memref<1x8x128xf32, #tpu.memory_space<vmem>>, vector<1x8x128xf32>
      tpu.vector_store %arg4[%c0_13, %c0_14, %c0_15], %16 {strides = array<i32>} : memref<1x8x128xf32, #tpu.memory_space<vmem>>, vector<1x8x128xf32>,
    } else {
    }
    return
  }
  func.func @transform_0(%arg0: i32, %arg1: i32) -> (i32, i32) {
    %c1_i32 = arith.constant 1 : i32
    %0 = arith.muli %arg0, %c1_i32 : i32
    %1 = arith.addi %0, %arg1 : i32
    %c0_i32 = arith.constant 0 : i32
    %c0_i32_0 = arith.constant 0 : i32
    return %1, %c0_i32 : i32, i32
  }
  func.func @transform_1(%arg0: i32, %arg1: i32) -> (i32, i32) {
    %c0_i32 = arith.constant 0 : i32
    %c0_i32_0 = arith.constant 0 : i32
    %c0_i32_1 = arith.constant 0 : i32
    return %c0_i32, %c0_i32_0 : i32, i32
  }
  func.func @transform_2(%arg0: i32, %arg1: i32) -> (i32, i32, i32) {
    %c0_i32 = arith.constant 0 : i32
    %c0_i32_0 = arith.constant 0 : i32
    %c0_i32_1 = arith.constant 0 : i32
    return %arg0, %c0_i32, %c0_i32_0 : i32, i32, i32
  }
}

</mosaic_0001>

<llo_original>
// kernel: tpu_custom_call.1
$region0: #{tpu_custom_call.1}
  #allocation0 [shape = 'u32[]', space=smem, size = 0x4, offset = 0x4, fixed_abs, tag = 'smem constant byte address 0x4 - core index']
  #allocation1 [shape = 'u32[144,128]{1,0:T(1,128)}', space=vmem, size = 0x12000, scoped, tag = 'internal scratch']
  #allocation2 [shape = 'f32[8,128]{1,0:T(8,128)}', space=vmem, size = 0x1000, scoped, tag = 'scratch operand']
  %s0 = inlined_call_operand.hbm [shape: f32[1024,1024], index: 0, kind: input, shape index: {}]
  %s1 = inlined_call_operand.hbm [shape: f32[1024,128], index: 1, kind: input, shape index: {}]
  %s2 = inlined_call_operand.hbm [shape: f32[2,8,128], index: 2, kind: output, shape index: {}]
  %s3 = sld [smem:[#allocation0]]
  $region57: #{tpu_custom_call.1} parent=0
    _
  %s5 = ssub.s32 1, %s3
  %s6 = scalar_select 0, %s5, %s3
  $region1: #{tpu_custom_call.1} parent=0
    #allocation3 [shape = 'u8[4194304]{0}', space=vmem, size = 0x400000, scoped, tag = 'input window, operand 0']
    #allocation4 [shape = 's32[2]{0}', space=sflag, size = 0x8, scoped, tag = 'scoped memory for tpu_custom_call.1']
    #allocation5 [shape = 's32[2]{0}', space=sflag, size = 0x8, scoped, tag = 'scoped memory for tpu_custom_call.1']
    #allocation6 [shape = 'u8[524288]{0}', space=vmem, size = 0x80000, scoped, tag = 'input window, operand 1, single buffered']
    #allocation7 [shape = 's32[1]{0}', space=sflag, size = 0x4, scoped, tag = 'scoped memory for tpu_custom_call.1']
    #allocation8 [shape = 'u8[8192]{0}', space=vmem, size = 0x2000, scoped, tag = 'output window, operand 0']
    %7 = vsyncpa [#allocation4], 0
    %s8 = scalar_lea.sflag [#allocation4], 1
    %9 = vsyncpa %s8, 0
    %10 = vsyncpa [#allocation7], 0
    %11 = vsyncpa [#allocation5], 0
    %s12 = scalar_lea.sflag [#allocation5], 1
    %13 = vsyncpa %s12, 0
    loop: start=0, step=1, limit=4
    $region2: #{tpu_custom_call.1} parent=1 // loop_pre_header
      _
    $region3: #{tpu_custom_call.1} parent=1 // loop_header
      %s15 = sphi 0, %s19
      %p16 = scmp.ge.s32.totalorder %s15, 4
      %s22 = sphi 0, %s34
      %s23 = sphi 0, %s30
      %s24 = sphi 0, %s22
      %s25 = sphi 0, %s23
      %s26 = sphi 0, %s24
      %s27 = sphi 0, %s25
      %s39 = sphi 0, %s41
      %s42 = sphi 0, %s39
      %s43 = sphi 0, %s42
      %s59 = sphi 0, %s43
      %s63 = sphi 0, %s63
      %s65 = sphi 0, %s63
      %s66 = sphi 0, %s65
      %s80 = sphi 0, %s66
      %s86 = sphi 0, %s88
      %s89 = sphi 0, %s86
      %s90 = sphi 0, %s89
      %s106 = sphi 0, %s90
    $region4: #{tpu_custom_call.1} parent=1 // loop_header_branch
      %18 = sbr.rel (%p16) target = $region8
    $region5: #{tpu_custom_call.1} parent=1 // loop_body
      %s20 = ssub.s32 %s15, 1
      %s21 = ssub.s32 %s15, 2
      %s28 = sadd.s32 1, %s23
      %p29 = scmp.ge.s32.totalorder %s28, 1
      %s30 = scalar_select %p29, 0, %s28
      %s31 = sadd.s32 1, %s22
      %s32 = scalar_select %p29, %s31, %s22
      %p33 = scmp.ge.s32.totalorder %s32, 2
      %s34 = scalar_select %p33, 0, %s32
      %s35 = sadd.s32 %s22, %s23
      %s36 = sadd.s32 %s34, %s30
      %s37 = ssub.s32 %s35, %s36
      %p38 = scmp.eq.s32.totalorder %s37, 0
      %s40 = sadd.s32 %s39, 1
      %s41 = scalar_select %p38, %s39, %s40
      %p44 = pneg %p38
      %p45 = scmp.eq.s32.totalorder %s15, 1
      %p46 = por %p44, %p45
      %p47 = scmp.ne.s32.totalorder %s39, %s42
      %p48 = scmp.eq.s32.totalorder %s15, 0
      %p49 = por %p47, %p48
      %p50 = scmp.ne.s32.totalorder %s39, %s42
      %p51 = scmp.eq.s32.totalorder %s20, 1
      %p52 = por %p50, %p51
      %p53 = scmp.ne.s32.totalorder %s42, %s43
      %p54 = scmp.eq.s32.totalorder %s20, 0
      %p55 = por %p53, %p54
      %p56 = scmp.ne.s32.totalorder %s42, %s43
      %p57 = scmp.eq.s32.totalorder %s21, 1
      %p58 = por %p56, %p57
      %p60 = scmp.ne.s32.totalorder %s43, %s59
      %p61 = scmp.eq.s32.totalorder %s21, 0
      %p62 = por %p60, %p61
      %s64 = sadd.s32 %s63, 1
      %p67 = scmp.eq.s32.totalorder %s15, 1
      %p68 = scmp.ne.s32.totalorder %s63, %s65
      %p69 = scmp.eq.s32.totalorder %s15, 0
      %p70 = por %p68, %p69
      %p71 = scmp.ne.s32.totalorder %s63, %s65
      %p72 = scmp.eq.s32.totalorder %s20, 1
      %p73 = por %p71, %p72
      %p74 = scmp.ne.s32.totalorder %s65, %s66
      %p75 = scmp.eq.s32.totalorder %s20, 0
      %p76 = por %p74, %p75
      %p77 = scmp.ne.s32.totalorder %s65, %s66
      %p78 = scmp.eq.s32.totalorder %s21, 1
      %p79 = por %p77, %p78
      %p81 = scmp.ne.s32.totalorder %s66, %s80
      %p82 = scmp.eq.s32.totalorder %s21, 0
      %p83 = por %p81, %p82
      %s84 = ssub.s32 %s22, %s34
      %p85 = scmp.eq.s32.totalorder %s84, 0
      %s87 = sadd.s32 %s86, 1
      %s88 = scalar_select %p85, %s86, %s87
      %p91 = pneg %p85
      %p92 = scmp.eq.s32.totalorder %s15, 1
      %p93 = por %p91, %p92
      %p94 = scmp.ne.s32.totalorder %s86, %s89
      %p95 = scmp.eq.s32.totalorder %s15, 0
      %p96 = por %p94, %p95
      %p97 = scmp.ne.s32.totalorder %s86, %s89
      %p98 = scmp.eq.s32.totalorder %s20, 1
      %p99 = por %p97, %p98
      %p100 = scmp.ne.s32.totalorder %s89, %s90
      %p101 = scmp.eq.s32.totalorder %s20, 0
      %p102 = por %p100, %p101
      %p103 = scmp.ne.s32.totalorder %s89, %s90
      %p104 = scmp.eq.s32.totalorder %s21, 1
      %p105 = por %p103, %p104
      %p107 = scmp.ne.s32.totalorder %s90, %s106
      %p108 = scmp.eq.s32.totalorder %s21, 0
      %p109 = por %p107, %p108
      %p110 = scmp.le.s32.totalorder 1, %s15
      %p111 = scmp.lt.s32.totalorder %s15, 3
      %p112 = pnand %p110, %p111
      %p113 = pneg %p112
      // Predicated region
      $region9: #{tpu_custom_call.1} parent=5 // pred_check
        _
      $region10: #{tpu_custom_call.1} parent=5 // pred_check_branch
        %115 = sbr.rel (%p112) target = $region12
      $region11: #{tpu_custom_call.1} parent=5 // pred_region
        %s116 = ssub.s32 %s15, 1
        // Predicated region
        $region13: #{tpu_custom_call.1} parent=11 // pred_check
          %p117 = pneg %p76
        $region14: #{tpu_custom_call.1} parent=11 // pred_check_branch
          %119 = sbr.rel (%p117) target = $region16
        $region15: #{tpu_custom_call.1} parent=11 // pred_region
          %s121 = ssub.s32 16384, 16384
          %122 = vsyncadd [#allocation7], %s121
          %s123 = sshll.u32 [#allocation6], 4
          %s124 = int_to_ptr.vmem [resolvable:$true] %s123
          %129 = dma.hbm_to_vmem [thread:$0]  %s1, 16384, %s124, [#allocation7], 128, 128, 8
        $region16: #{tpu_custom_call.1} parent=11 // pred_fallthru
          _
      $region12: #{tpu_custom_call.1} parent=5 // pred_fallthru
        _
      %p130 = scmp.lt.s32.totalorder %s15, 2
      // Predicated region
      $region17: #{tpu_custom_call.1} parent=5 // pred_check
        %p131 = pneg %p130
      $region18: #{tpu_custom_call.1} parent=5 // pred_check_branch
        %133 = sbr.rel (%p131) target = $region20
      $region19: #{tpu_custom_call.1} parent=5 // pred_region
        // Predicated region
        $region21: #{tpu_custom_call.1} parent=19 // pred_check
          %p134 = pneg %p49
        $region22: #{tpu_custom_call.1} parent=19 // pred_check_branch
          %136 = sbr.rel (%p134) target = $region24
        $region23: #{tpu_custom_call.1} parent=19 // pred_region
          %s137 = sand.u32 %s39, 1
          %s138 = scalar_lea.sflag [#allocation4], %s137
          %s139 = sand.u32 %s39, 1
          %s140 = smul.addr %s139, 4096
          %s141 = scalar_lea.vmem [#allocation3], %s140
          %s142 = sadd.s32 %s22, %s23
          %s143 = smul.u32 64, %s142
          %s145 = ssub.s32 65536, 65536
          %146 = vsyncadd %s138, %s145
          %s147 = smul.addr %s143, 8
          %s148 = smul.addr %s147, 128
          %s149 = scalar_lea.hbm %s0, %s148
          %s150 = sshll.u32 %s141, 4
          %s151 = int_to_ptr.vmem [resolvable:$true] %s150
          %156 = dma.hbm_to_vmem [thread:$0]  %s149, 65536, %s151, %s138, 1024, 1024, 64
        $region24: #{tpu_custom_call.1} parent=19 // pred_fallthru
          _
      $region20: #{tpu_custom_call.1} parent=5 // pred_fallthru
        _
      %p157 = scmp.le.s32.totalorder 1, %s15
      %p158 = scmp.lt.s32.totalorder %s15, 3
      %p159 = pnand %p157, %p158
      %p160 = pneg %p159
      // Predicated region
      $region25: #{tpu_custom_call.1} parent=5 // pred_check
        _
      $region26: #{tpu_custom_call.1} parent=5 // pred_check_branch
        %162 = sbr.rel (%p159) target = $region28
      $region27: #{tpu_custom_call.1} parent=5 // pred_region
        %s163 = ssub.s32 %s15, 1
        %s164 = sand.u32 %s42, 1
        %s165 = scalar_lea.sflag [#allocation4], %s164
        %s166 = sand.u32 %s42, 1
        %s167 = smul.addr %s166, 4096
        %s168 = scalar_lea.vmem [#allocation3], %s167
        // Predicated region
        $region29: #{tpu_custom_call.1} parent=27 // pred_check
          %p169 = pneg %p55
        $region30: #{tpu_custom_call.1} parent=27 // pred_check_branch
          %171 = sbr.rel (%p169) target = $region32
        $region31: #{tpu_custom_call.1} parent=27 // pred_region
          %172 = dma.done %s165, 65536
        $region32: #{tpu_custom_call.1} parent=27 // pred_fallthru
          _
        // Predicated region
        $region33: #{tpu_custom_call.1} parent=27 // pred_check
          %p173 = pneg %p76
        $region34: #{tpu_custom_call.1} parent=27 // pred_check_branch
          %175 = sbr.rel (%p173) target = $region36
        $region35: #{tpu_custom_call.1} parent=27 // pred_region
          %176 = dma.done [#allocation7], 16384
        $region36: #{tpu_custom_call.1} parent=27 // pred_fallthru
          _
        %s177 = sand.u32 %s42, 1
        %s178 = scalar_lea.sflag [#allocation4], %s177
        %s179 = sand.u32 %s42, 1
        %s180 = smul.addr %s179, 4096
        %s181 = scalar_lea.vmem [#allocation3], %s180
        %p182 = pneg %p55
        %p183 = pneg %p52
        %p184 = pneg %p76
        %p185 = pneg %p73
        %p186 = pneg %p102
        %p187 = pneg %p99
        %s188 = sand.u32 %s89, 1
        %s189 = scalar_lea.sflag [#allocation5], %s188
        %s190 = sand.u32 %s89, 1
        %s191 = smul.addr %s190, 8
        %s192 = scalar_lea.vmem [#allocation8], %s191
        %s193 = sadd.s32 %s24, %s25
        %s194 = smul.u32 64, %s193
        %p195 = scmp.eq.s32.totalorder %s25, 0
        // Predicated region
        $region37: #{tpu_custom_call.1} parent=27 // pred_check
          %p196 = pneg %p195
        $region38: #{tpu_custom_call.1} parent=27 // pred_check_branch
          %198 = sbr.rel (%p196) target = $region40
        $region39: #{tpu_custom_call.1} parent=27 // pred_region
          %199 = vst [vmem:[#allocation2] sm:$0xff] 0.0
        $region40: #{tpu_custom_call.1} parent=27 // pred_fallthru
          _
        %v200 = vld [vmem:[%s168] sm:$0xff]
        %v201 = vld [vmem:[%s168 + $0x8] sm:$0xff]
        %v202 = vld [vmem:[%s168 + $0x10] sm:$0xff]
        %v203 = vld [vmem:[%s168 + $0x18] sm:$0xff]
        %v204 = vld [vmem:[%s168 + $0x20] sm:$0xff]
        %v205 = vld [vmem:[%s168 + $0x28] sm:$0xff]
        %v206 = vld [vmem:[%s168 + $0x30] sm:$0xff]
        %v207 = vld [vmem:[%s168 + $0x38] sm:$0xff]
        %v208 = vld [vmem:[%s168 + $0x40] sm:$0xff]
        %v209 = vld [vmem:[%s168 + $0x48] sm:$0xff]
        %v210 = vld [vmem:[%s168 + $0x50] sm:$0xff]
        %v211 = vld [vmem:[%s168 + $0x58] sm:$0xff]
        %v212 = vld [vmem:[%s168 + $0x60] sm:$0xff]
        %v213 = vld [vmem:[%s168 + $0x68] sm:$0xff]
        %v214 = vld [vmem:[%s168 + $0x70] sm:$0xff]
        %v215 = vld [vmem:[%s168 + $0x78] sm:$0xff]
        %v216 = vld [vmem:[%s168 + $0x80] sm:$0xff]
        %v217 = vld [vmem:[%s168 + $0x88] sm:$0xff]
        %v218 = vld [vmem:[%s168 + $0x90] sm:$0xff]
        %v219 = vld [vmem:[%s168 + $0x98] sm:$0xff]
        %v220 = vld [vmem:[%s168 + $0xa0] sm:$0xff]
        %v221 = vld [vmem:[%s168 + $0xa8] sm:$0xff]
        %v222 = vld [vmem:[%s168 + $0xb0] sm:$0xff]
        %v223 = vld [vmem:[%s168 + $0xb8] sm:$0xff]
        %v224 = vld [vmem:[%s168 + $0xc0] sm:$0xff]
        %v225 = vld [vmem:[%s168 + $0xc8] sm:$0xff]
        %v226 = vld [vmem:[%s168 + $0xd0] sm:$0xff]
        %v227 = vld [vmem:[%s168 + $0xd8] sm:$0xff]
        %v228 = vld [vmem:[%s168 + $0xe0] sm:$0xff]
        %v229 = vld [vmem:[%s168 + $0xe8] sm:$0xff]
        %v230 = vld [vmem:[%s168 + $0xf0] sm:$0xff]
        %v231 = vld [vmem:[%s168 + $0xf8] sm:$0xff]
        %v232 = vld [vmem:[%s168 + $0x100] sm:$0xff]
        %v233 = vld [vmem:[%s168 + $0x108] sm:$0xff]
        %v234 = vld [vmem:[%s168 + $0x110] sm:$0xff]
        %v235 = vld [vmem:[%s168 + $0x118] sm:$0xff]
        %v236 = vld [vmem:[%s168 + $0x120] sm:$0xff]
        %v237 = vld [vmem:[%s168 + $0x128] sm:$0xff]
        %v238 = vld [vmem:[%s168 + $0x130] sm:$0xff]
        %v239 = vld [vmem:[%s168 + $0x138] sm:$0xff]
        %v240 = vld [vmem:[%s168 + $0x140] sm:$0xff]
        %v241 = vld [vmem:[%s168 + $0x148] sm:$0xff]
        %v242 = vld [vmem:[%s168 + $0x150] sm:$0xff]
        %v243 = vld [vmem:[%s168 + $0x158] sm:$0xff]
        %v244 = vld [vmem:[%s168 + $0x160] sm:$0xff]
        %v245 = vld [vmem:[%s168 + $0x168] sm:$0xff]
        %v246 = vld [vmem:[%s168 + $0x170] sm:$0xff]
        %v247 = vld [vmem:[%s168 + $0x178] sm:$0xff]
        %v248 = vld [vmem:[%s168 + $0x180] sm:$0xff]
        %v249 = vld [vmem:[%s168 + $0x188] sm:$0xff]
        %v250 = vld [vmem:[%s168 + $0x190] sm:$0xff]
        %v251 = vld [vmem:[%s168 + $0x198] sm:$0xff]
        %v252 = vld [vmem:[%s168 + $0x1a0] sm:$0xff]
        %v253 = vld [vmem:[%s168 + $0x1a8] sm:$0xff]
        %v254 = vld [vmem:[%s168 + $0x1b0] sm:$0xff]
        %v255 = vld [vmem:[%s168 + $0x1b8] sm:$0xff]
        %v256 = vld [vmem:[%s168 + $0x1c0] sm:$0xff]
        %v257 = vld [vmem:[%s168 + $0x1c8] sm:$0xff]
        %v258 = vld [vmem:[%s168 + $0x1d0] sm:$0xff]
        %v259 = vld [vmem:[%s168 + $0x1d8] sm:$0xff]
        %v260 = vld [vmem:[%s168 + $0x1e0] sm:$0xff]
        %v261 = vld [vmem:[%s168 + $0x1e8] sm:$0xff]
        %v262 = vld [vmem:[%s168 + $0x1f0] sm:$0xff]
        %v263 = vld [vmem:[%s168 + $0x1f8] sm:$0xff]
        %v264 = vld [vmem:[%s168 + $0x200] sm:$0xff]
        %v265 = vld [vmem:[%s168 + $0x208] sm:$0xff]
        %v266 = vld [vmem:[%s168 + $0x210] sm:$0xff]
        %v267 = vld [vmem:[%s168 + $0x218] sm:$0xff]
        %v268 = vld [vmem:[%s168 + $0x220] sm:$0xff]
        %v269 = vld [vmem:[%s168 + $0x228] sm:$0xff]
        %v270 = vld [vmem:[%s168 + $0x230] sm:$0xff]
        %v271 = vld [vmem:[%s168 + $0x238] sm:$0xff]
        %v272 = vld [vmem:[%s168 + $0x240] sm:$0xff]
        %v273 = vld [vmem:[%s168 + $0x248] sm:$0xff]
        %v274 = vld [vmem:[%s168 + $0x250] sm:$0xff]
        %v275 = vld [vmem:[%s168 + $0x258] sm:$0xff]
        %v276 = vld [vmem:[%s168 + $0x260] sm:$0xff]
        %v277 = vld [vmem:[%s168 + $0x268] sm:$0xff]
        %v278 = vld [vmem:[%s168 + $0x270] sm:$0xff]
        %v279 = vld [vmem:[%s168 + $0x278] sm:$0xff]
        %v280 = vld [vmem:[%s168 + $0x280] sm:$0xff]
        %v281 = vld [vmem:[%s168 + $0x288] sm:$0xff]
        %v282 = vld [vmem:[%s168 + $0x290] sm:$0xff]
        %v283 = vld [vmem:[%s168 + $0x298] sm:$0xff]
        %v284 = vld [vmem:[%s168 + $0x2a0] sm:$0xff]
        %v285 = vld [vmem:[%s168 + $0x2a8] sm:$0xff]
        %v286 = vld [vmem:[%s168 + $0x2b0] sm:$0xff]
        %v287 = vld [vmem:[%s168 + $0x2b8] sm:$0xff]
        %v288 = vld [vmem:[%s168 + $0x2c0] sm:$0xff]
        %v289 = vld [vmem:[%s168 + $0x2c8] sm:$0xff]
        %v290 = vld [vmem:[%s168 + $0x2d0] sm:$0xff]
        %v291 = vld [vmem:[%s168 + $0x2d8] sm:$0xff]
        %v292 = vld [vmem:[%s168 + $0x2e0] sm:$0xff]
        %v293 = vld [vmem:[%s168 + $0x2e8] sm:$0xff]
        %v294 = vld [vmem:[%s168 + $0x2f0] sm:$0xff]
        %v295 = vld [vmem:[%s168 + $0x2f8] sm:$0xff]
        %v296 = vld [vmem:[%s168 + $0x300] sm:$0xff]
        %v297 = vld [vmem:[%s168 + $0x308] sm:$0xff]
        %v298 = vld [vmem:[%s168 + $0x310] sm:$0xff]
        %v299 = vld [vmem:[%s168 + $0x318] sm:$0xff]
        %v300 = vld [vmem:[%s168 + $0x320] sm:$0xff]
        %v301 = vld [vmem:[%s168 + $0x328] sm:$0xff]
        %v302 = vld [vmem:[%s168 + $0x330] sm:$0xff]
        %v303 = vld [vmem:[%s168 + $0x338] sm:$0xff]
        %v304 = vld [vmem:[%s168 + $0x340] sm:$0xff]
        %v305 = vld [vmem:[%s168 + $0x348] sm:$0xff]
        %v306 = vld [vmem:[%s168 + $0x350] sm:$0xff]
        %v307 = vld [vmem:[%s168 + $0x358] sm:$0xff]
        %v308 = vld [vmem:[%s168 + $0x360] sm:$0xff]
        %v309 = vld [vmem:[%s168 + $0x368] sm:$0xff]
        %v310 = vld [vmem:[%s168 + $0x370] sm:$0xff]
        %v311 = vld [vmem:[%s168 + $0x378] sm:$0xff]
        %v312 = vld [vmem:[%s168 + $0x380] sm:$0xff]
        %v313 = vld [vmem:[%s168 + $0x388] sm:$0xff]
        %v314 = vld [vmem:[%s168 + $0x390] sm:$0xff]
        %v315 = vld [vmem:[%s168 + $0x398] sm:$0xff]
        %v316 = vld [vmem:[%s168 + $0x3a0] sm:$0xff]
        %v317 = vld [vmem:[%s168 + $0x3a8] sm:$0xff]
        %v318 = vld [vmem:[%s168 + $0x3b0] sm:$0xff]
        %v319 = vld [vmem:[%s168 + $0x3b8] sm:$0xff]
        %v320 = vld [vmem:[%s168 + $0x3c0] sm:$0xff]
        %v321 = vld [vmem:[%s168 + $0x3c8] sm:$0xff]
        %v322 = vld [vmem:[%s168 + $0x3d0] sm:$0xff]
        %v323 = vld [vmem:[%s168 + $0x3d8] sm:$0xff]
        %v324 = vld [vmem:[%s168 + $0x3e0] sm:$0xff]
        %v325 = vld [vmem:[%s168 + $0x3e8] sm:$0xff]
        %v326 = vld [vmem:[%s168 + $0x3f0] sm:$0xff]
        %v327 = vld [vmem:[%s168 + $0x3f8] sm:$0xff]
        %v328 = vld [vmem:[%s168 + $0x400] sm:$0xff]
        %v329 = vld [vmem:[%s168 + $0x408] sm:$0xff]
        %v330 = vld [vmem:[%s168 + $0x410] sm:$0xff]
        %v331 = vld [vmem:[%s168 + $0x418] sm:$0xff]
        %v332 = vld [vmem:[%s168 + $0x420] sm:$0xff]
        %v333 = vld [vmem:[%s168 + $0x428] sm:$0xff]
        %v334 = vld [vmem:[%s168 + $0x430] sm:$0xff]
        %v335 = vld [vmem:[%s168 + $0x438] sm:$0xff]
        %v336 = vld [vmem:[%s168 + $0x440] sm:$0xff]
        %v337 = vld [vmem:[%s168 + $0x448] sm:$0xff]
        %v338 = vld [vmem:[%s168 + $0x450] sm:$0xff]
        %v339 = vld [vmem:[%s168 + $0x458] sm:$0xff]
        %v340 = vld [vmem:[%s168 + $0x460] sm:$0xff]
        %v341 = vld [vmem:[%s168 + $0x468] sm:$0xff]
        %v342 = vld [vmem:[%s168 + $0x470] sm:$0xff]
        %v343 = vld [vmem:[%s168 + $0x478] sm:$0xff]
        %v344 = vld [vmem:[%s168 + $0x480] sm:$0xff]
        %v345 = vld [vmem:[%s168 + $0x488] sm:$0xff]
        %v346 = vld [vmem:[%s168 + $0x490] sm:$0xff]
        %v347 = vld [vmem:[%s168 + $0x498] sm:$0xff]
        %v348 = vld [vmem:[%s168 + $0x4a0] sm:$0xff]
        %v349 = vld [vmem:[%s168 + $0x4a8] sm:$0xff]
        %v350 = vld [vmem:[%s168 + $0x4b0] sm:$0xff]
        %v351 = vld [vmem:[%s168 + $0x4b8] sm:$0xff]
        %v352 = vld [vmem:[%s168 + $0x4c0] sm:$0xff]
        %v353 = vld [vmem:[%s168 + $0x4c8] sm:$0xff]
        %v354 = vld [vmem:[%s168 + $0x4d0] sm:$0xff]
        %v355 = vld [vmem:[%s168 + $0x4d8] sm:$0xff]
        %v356 = vld [vmem:[%s168 + $0x4e0] sm:$0xff]
        %v357 = vld [vmem:[%s168 + $0x4e8] sm:$0xff]
        %v358 = vld [vmem:[%s168 + $0x4f0] sm:$0xff]
        %v359 = vld [vmem:[%s168 + $0x4f8] sm:$0xff]
        %v360 = vld [vmem:[%s168 + $0x500] sm:$0xff]
        %v361 = vld [vmem:[%s168 + $0x508] sm:$0xff]
        %v362 = vld [vmem:[%s168 + $0x510] sm:$0xff]
        %v363 = vld [vmem:[%s168 + $0x518] sm:$0xff]
        %v364 = vld [vmem:[%s168 + $0x520] sm:$0xff]
        %v365 = vld [vmem:[%s168 + $0x528] sm:$0xff]
        %v366 = vld [vmem:[%s168 + $0x530] sm:$0xff]
        %v367 = vld [vmem:[%s168 + $0x538] sm:$0xff]
        %v368 = vld [vmem:[%s168 + $0x540] sm:$0xff]
        %v369 = vld [vmem:[%s168 + $0x548] sm:$0xff]
        %v370 = vld [vmem:[%s168 + $0x550] sm:$0xff]
        %v371 = vld [vmem:[%s168 + $0x558] sm:$0xff]
        %v372 = vld [vmem:[%s168 + $0x560] sm:$0xff]
        %v373 = vld [vmem:[%s168 + $0x568] sm:$0xff]
        %v374 = vld [vmem:[%s168 + $0x570] sm:$0xff]
        %v375 = vld [vmem:[%s168 + $0x578] sm:$0xff]
        %v376 = vld [vmem:[%s168 + $0x580] sm:$0xff]
        %v377 = vld [vmem:[%s168 + $0x588] sm:$0xff]
        %v378 = vld [vmem:[%s168 + $0x590] sm:$0xff]
        %v379 = vld [vmem:[%s168 + $0x598] sm:$0xff]
        %v380 = vld [vmem:[%s168 + $0x5a0] sm:$0xff]
        %v381 = vld [vmem:[%s168 + $0x5a8] sm:$0xff]
        %v382 = vld [vmem:[%s168 + $0x5b0] sm:$0xff]
        %v383 = vld [vmem:[%s168 + $0x5b8] sm:$0xff]
        %v384 = vld [vmem:[%s168 + $0x5c0] sm:$0xff]
        %v385 = vld [vmem:[%s168 + $0x5c8] sm:$0xff]
        %v386 = vld [vmem:[%s168 + $0x5d0] sm:$0xff]
        %v387 = vld [vmem:[%s168 + $0x5d8] sm:$0xff]
        %v388 = vld [vmem:[%s168 + $0x5e0] sm:$0xff]
        %v389 = vld [vmem:[%s168 + $0x5e8] sm:$0xff]
        %v390 = vld [vmem:[%s168 + $0x5f0] sm:$0xff]
        %v391 = vld [vmem:[%s168 + $0x5f8] sm:$0xff]
        %v392 = vld [vmem:[%s168 + $0x600] sm:$0xff]
        %v393 = vld [vmem:[%s168 + $0x608] sm:$0xff]
        %v394 = vld [vmem:[%s168 + $0x610] sm:$0xff]
        %v395 = vld [vmem:[%s168 + $0x618] sm:$0xff]
        %v396 = vld [vmem:[%s168 + $0x620] sm:$0xff]
        %v397 = vld [vmem:[%s168 + $0x628] sm:$0xff]
        %v398 = vld [vmem:[%s168 + $0x630] sm:$0xff]
        %v399 = vld [vmem:[%s168 + $0x638] sm:$0xff]
        %v400 = vld [vmem:[%s168 + $0x640] sm:$0xff]
        %v401 = vld [vmem:[%s168 + $0x648] sm:$0xff]
        %v402 = vld [vmem:[%s168 + $0x650] sm:$0xff]
        %v403 = vld [vmem:[%s168 + $0x658] sm:$0xff]
        %v404 = vld [vmem:[%s168 + $0x660] sm:$0xff]
        %v405 = vld [vmem:[%s168 + $0x668] sm:$0xff]
        %v406 = vld [vmem:[%s168 + $0x670] sm:$0xff]
        %v407 = vld [vmem:[%s168 + $0x678] sm:$0xff]
        %v408 = vld [vmem:[%s168 + $0x680] sm:$0xff]
        %v409 = vld [vmem:[%s168 + $0x688] sm:$0xff]
        %v410 = vld [vmem:[%s168 + $0x690] sm:$0xff]
        %v411 = vld [vmem:[%s168 + $0x698] sm:$0xff]
        %v412 = vld [vmem:[%s168 + $0x6a0] sm:$0xff]
        %v413 = vld [vmem:[%s168 + $0x6a8] sm:$0xff]
        %v414 = vld [vmem:[%s168 + $0x6b0] sm:$0xff]
        %v415 = vld [vmem:[%s168 + $0x6b8] sm:$0xff]
        %v416 = vld [vmem:[%s168 + $0x6c0] sm:$0xff]
        %v417 = vld [vmem:[%s168 + $0x6c8] sm:$0xff]
        %v418 = vld [vmem:[%s168 + $0x6d0] sm:$0xff]
        %v419 = vld [vmem:[%s168 + $0x6d8] sm:$0xff]
        %v420 = vld [vmem:[%s168 + $0x6e0] sm:$0xff]
        %v421 = vld [vmem:[%s168 + $0x6e8] sm:$0xff]
        %v422 = vld [vmem:[%s168 + $0x6f0] sm:$0xff]
        %v423 = vld [vmem:[%s168 + $0x6f8] sm:$0xff]
        %v424 = vld [vmem:[%s168 + $0x700] sm:$0xff]
        %v425 = vld [vmem:[%s168 + $0x708] sm:$0xff]
        %v426 = vld [vmem:[%s168 + $0x710] sm:$0xff]
        %v427 = vld [vmem:[%s168 + $0x718] sm:$0xff]
        %v428 = vld [vmem:[%s168 + $0x720] sm:$0xff]
        %v429 = vld [vmem:[%s168 + $0x728] sm:$0xff]
        %v430 = vld [vmem:[%s168 + $0x730] sm:$0xff]
        %v431 = vld [vmem:[%s168 + $0x738] sm:$0xff]
        %v432 = vld [vmem:[%s168 + $0x740] sm:$0xff]
        %v433 = vld [vmem:[%s168 + $0x748] sm:$0xff]
        %v434 = vld [vmem:[%s168 + $0x750] sm:$0xff]
        %v435 = vld [vmem:[%s168 + $0x758] sm:$0xff]
        %v436 = vld [vmem:[%s168 + $0x760] sm:$0xff]
        %v437 = vld [vmem:[%s168 + $0x768] sm:$0xff]
        %v438 = vld [vmem:[%s168 + $0x770] sm:$0xff]
        %v439 = vld [vmem:[%s168 + $0x778] sm:$0xff]
        %v440 = vld [vmem:[%s168 + $0x780] sm:$0xff]
        %v441 = vld [vmem:[%s168 + $0x788] sm:$0xff]
        %v442 = vld [vmem:[%s168 + $0x790] sm:$0xff]
        %v443 = vld [vmem:[%s168 + $0x798] sm:$0xff]
        %v444 = vld [vmem:[%s168 + $0x7a0] sm:$0xff]
        %v445 = vld [vmem:[%s168 + $0x7a8] sm:$0xff]
        %v446 = vld [vmem:[%s168 + $0x7b0] sm:$0xff]
        %v447 = vld [vmem:[%s168 + $0x7b8] sm:$0xff]
        %v448 = vld [vmem:[%s168 + $0x7c0] sm:$0xff]
        %v449 = vld [vmem:[%s168 + $0x7c8] sm:$0xff]
        %v450 = vld [vmem:[%s168 + $0x7d0] sm:$0xff]
        %v451 = vld [vmem:[%s168 + $0x7d8] sm:$0xff]
        %v452 = vld [vmem:[%s168 + $0x7e0] sm:$0xff]
        %v453 = vld [vmem:[%s168 + $0x7e8] sm:$0xff]
        %v454 = vld [vmem:[%s168 + $0x7f0] sm:$0xff]
        %v455 = vld [vmem:[%s168 + $0x7f8] sm:$0xff]
        %v456 = vld [vmem:[%s168 + $0x800] sm:$0xff]
        %v457 = vld [vmem:[%s168 + $0x808] sm:$0xff]
        %v458 = vld [vmem:[%s168 + $0x810] sm:$0xff]
        %v459 = vld [vmem:[%s168 + $0x818] sm:$0xff]
        %v460 = vld [vmem:[%s168 + $0x820] sm:$0xff]
        %v461 = vld [vmem:[%s168 + $0x828] sm:$0xff]
        %v462 = vld [vmem:[%s168 + $0x830] sm:$0xff]
        %v463 = vld [vmem:[%s168 + $0x838] sm:$0xff]
        %v464 = vld [vmem:[%s168 + $0x840] sm:$0xff]
        %v465 = vld [vmem:[%s168 + $0x848] sm:$0xff]
        %v466 = vld [vmem:[%s168 + $0x850] sm:$0xff]
        %v467 = vld [vmem:[%s168 + $0x858] sm:$0xff]
        %v468 = vld [vmem:[%s168 + $0x860] sm:$0xff]
        %v469 = vld [vmem:[%s168 + $0x868] sm:$0xff]
        %v470 = vld [vmem:[%s168 + $0x870] sm:$0xff]
        %v471 = vld [vmem:[%s168 + $0x878] sm:$0xff]
        %v472 = vld [vmem:[%s168 + $0x880] sm:$0xff]
        %v473 = vld [vmem:[%s168 + $0x888] sm:$0xff]
        %v474 = vld [vmem:[%s168 + $0x890] sm:$0xff]
        %v475 = vld [vmem:[%s168 + $0x898] sm:$0xff]
        %v476 = vld [vmem:[%s168 + $0x8a0] sm:$0xff]
        %v477 = vld [vmem:[%s168 + $0x8a8] sm:$0xff]
        %v478 = vld [vmem:[%s168 + $0x8b0] sm:$0xff]
        %v479 = vld [vmem:[%s168 + $0x8b8] sm:$0xff]
        %v480 = vld [vmem:[%s168 + $0x8c0] sm:$0xff]
        %v481 = vld [vmem:[%s168 + $0x8c8] sm:$0xff]
        %v482 = vld [vmem:[%s168 + $0x8d0] sm:$0xff]
        %v483 = vld [vmem:[%s168 + $0x8d8] sm:$0xff]
        %v484 = vld [vmem:[%s168 + $0x8e0] sm:$0xff]
        %v485 = vld [vmem:[%s168 + $0x8e8] sm:$0xff]
        %v486 = vld [vmem:[%s168 + $0x8f0] sm:$0xff]
        %v487 = vld [vmem:[%s168 + $0x8f8] sm:$0xff]
        %v488 = vld [vmem:[%s168 + $0x900] sm:$0xff]
        %v489 = vld [vmem:[%s168 + $0x908] sm:$0xff]
        %v490 = vld [vmem:[%s168 + $0x910] sm:$0xff]
        %v491 = vld [vmem:[%s168 + $0x918] sm:$0xff]
        %v492 = vld [vmem:[%s168 + $0x920] sm:$0xff]
        %v493 = vld [vmem:[%s168 + $0x928] sm:$0xff]
        %v494 = vld [vmem:[%s168 + $0x930] sm:$0xff]
        %v495 = vld [vmem:[%s168 + $0x938] sm:$0xff]
        %v496 = vld [vmem:[%s168 + $0x940] sm:$0xff]
        %v497 = vld [vmem:[%s168 + $0x948] sm:$0xff]
        %v498 = vld [vmem:[%s168 + $0x950] sm:$0xff]
        %v499 = vld [vmem:[%s168 + $0x958] sm:$0xff]
        %v500 = vld [vmem:[%s168 + $0x960] sm:$0xff]
        %v501 = vld [vmem:[%s168 + $0x968] sm:$0xff]
        %v502 = vld [vmem:[%s168 + $0x970] sm:$0xff]
        %v503 = vld [vmem:[%s168 + $0x978] sm:$0xff]
        %v504 = vld [vmem:[%s168 + $0x980] sm:$0xff]
        %v505 = vld [vmem:[%s168 + $0x988] sm:$0xff]
        %v506 = vld [vmem:[%s168 + $0x990] sm:$0xff]
        %v507 = vld [vmem:[%s168 + $0x998] sm:$0xff]
        %v508 = vld [vmem:[%s168 + $0x9a0] sm:$0xff]
        %v509 = vld [vmem:[%s168 + $0x9a8] sm:$0xff]
        %v510 = vld [vmem:[%s168 + $0x9b0] sm:$0xff]
        %v511 = vld [vmem:[%s168 + $0x9b8] sm:$0xff]
        %v512 = vld [vmem:[%s168 + $0x9c0] sm:$0xff]
        %v513 = vld [vmem:[%s168 + $0x9c8] sm:$0xff]
        %v514 = vld [vmem:[%s168 + $0x9d0] sm:$0xff]
        %v515 = vld [vmem:[%s168 + $0x9d8] sm:$0xff]
        %v516 = vld [vmem:[%s168 + $0x9e0] sm:$0xff]
        %v517 = vld [vmem:[%s168 + $0x9e8] sm:$0xff]
        %v518 = vld [vmem:[%s168 + $0x9f0] sm:$0xff]
        %v519 = vld [vmem:[%s168 + $0x9f8] sm:$0xff]
        %v520 = vld [vmem:[%s168 + $0xa00] sm:$0xff]
        %v521 = vld [vmem:[%s168 + $0xa08] sm:$0xff]
        %v522 = vld [vmem:[%s168 + $0xa10] sm:$0xff]
        %v523 = vld [vmem:[%s168 + $0xa18] sm:$0xff]
        %v524 = vld [vmem:[%s168 + $0xa20] sm:$0xff]
        %v525 = vld [vmem:[%s168 + $0xa28] sm:$0xff]
        %v526 = vld [vmem:[%s168 + $0xa30] sm:$0xff]
        %v527 = vld [vmem:[%s168 + $0xa38] sm:$0xff]
        %v528 = vld [vmem:[%s168 + $0xa40] sm:$0xff]
        %v529 = vld [vmem:[%s168 + $0xa48] sm:$0xff]
        %v530 = vld [vmem:[%s168 + $0xa50] sm:$0xff]
        %v531 = vld [vmem:[%s168 + $0xa58] sm:$0xff]
        %v532 = vld [vmem:[%s168 + $0xa60] sm:$0xff]
        %v533 = vld [vmem:[%s168 + $0xa68] sm:$0xff]
        %v534 = vld [vmem:[%s168 + $0xa70] sm:$0xff]
        %v535 = vld [vmem:[%s168 + $0xa78] sm:$0xff]
        %v536 = vld [vmem:[%s168 + $0xa80] sm:$0xff]
        %v537 = vld [vmem:[%s168 + $0xa88] sm:$0xff]
        %v538 = vld [vmem:[%s168 + $0xa90] sm:$0xff]
        %v539 = vld [vmem:[%s168 + $0xa98] sm:$0xff]
        %v540 = vld [vmem:[%s168 + $0xaa0] sm:$0xff]
        %v541 = vld [vmem:[%s168 + $0xaa8] sm:$0xff]
        %v542 = vld [vmem:[%s168 + $0xab0] sm:$0xff]
        %v543 = vld [vmem:[%s168 + $0xab8] sm:$0xff]
        %v544 = vld [vmem:[%s168 + $0xac0] sm:$0xff]
        %v545 = vld [vmem:[%s168 + $0xac8] sm:$0xff]
        %v546 = vld [vmem:[%s168 + $0xad0] sm:$0xff]
        %v547 = vld [vmem:[%s168 + $0xad8] sm:$0xff]
        %v548 = vld [vmem:[%s168 + $0xae0] sm:$0xff]
        %v549 = vld [vmem:[%s168 + $0xae8] sm:$0xff]
        %v550 = vld [vmem:[%s168 + $0xaf0] sm:$0xff]
        %v551 = vld [vmem:[%s168 + $0xaf8] sm:$0xff]
        %v552 = vld [vmem:[%s168 + $0xb00] sm:$0xff]
        %v553 = vld [vmem:[%s168 + $0xb08] sm:$0xff]
        %v554 = vld [vmem:[%s168 + $0xb10] sm:$0xff]
        %v555 = vld [vmem:[%s168 + $0xb18] sm:$0xff]
        %v556 = vld [vmem:[%s168 + $0xb20] sm:$0xff]
        %v557 = vld [vmem:[%s168 + $0xb28] sm:$0xff]
        %v558 = vld [vmem:[%s168 + $0xb30] sm:$0xff]
        %v559 = vld [vmem:[%s168 + $0xb38] sm:$0xff]
        %v560 = vld [vmem:[%s168 + $0xb40] sm:$0xff]
        %v561 = vld [vmem:[%s168 + $0xb48] sm:$0xff]
        %v562 = vld [vmem:[%s168 + $0xb50] sm:$0xff]
        %v563 = vld [vmem:[%s168 + $0xb58] sm:$0xff]
        %v564 = vld [vmem:[%s168 + $0xb60] sm:$0xff]
        %v565 = vld [vmem:[%s168 + $0xb68] sm:$0xff]
        %v566 = vld [vmem:[%s168 + $0xb70] sm:$0xff]
        %v567 = vld [vmem:[%s168 + $0xb78] sm:$0xff]
        %v568 = vld [vmem:[%s168 + $0xb80] sm:$0xff]
        %v569 = vld [vmem:[%s168 + $0xb88] sm:$0xff]
        %v570 = vld [vmem:[%s168 + $0xb90] sm:$0xff]
        %v571 = vld [vmem:[%s168 + $0xb98] sm:$0xff]
        %v572 = vld [vmem:[%s168 + $0xba0] sm:$0xff]
        %v573 = vld [vmem:[%s168 + $0xba8] sm:$0xff]
        %v574 = vld [vmem:[%s168 + $0xbb0] sm:$0xff]
        %v575 = vld [vmem:[%s168 + $0xbb8] sm:$0xff]
        %v576 = vld [vmem:[%s168 + $0xbc0] sm:$0xff]
        %v577 = vld [vmem:[%s168 + $0xbc8] sm:$0xff]
        %v578 = vld [vmem:[%s168 + $0xbd0] sm:$0xff]
        %v579 = vld [vmem:[%s168 + $0xbd8] sm:$0xff]
        %v580 = vld [vmem:[%s168 + $0xbe0] sm:$0xff]
        %v581 = vld [vmem:[%s168 + $0xbe8] sm:$0xff]
        %v582 = vld [vmem:[%s168 + $0xbf0] sm:$0xff]
        %v583 = vld [vmem:[%s168 + $0xbf8] sm:$0xff]
        %v584 = vld [vmem:[%s168 + $0xc00] sm:$0xff]
        %v585 = vld [vmem:[%s168 + $0xc08] sm:$0xff]
        %v586 = vld [vmem:[%s168 + $0xc10] sm:$0xff]
        %v587 = vld [vmem:[%s168 + $0xc18] sm:$0xff]
        %v588 = vld [vmem:[%s168 + $0xc20] sm:$0xff]
        %v589 = vld [vmem:[%s168 + $0xc28] sm:$0xff]
        %v590 = vld [vmem:[%s168 + $0xc30] sm:$0xff]
        %v591 = vld [vmem:[%s168 + $0xc38] sm:$0xff]
        %v592 = vld [vmem:[%s168 + $0xc40] sm:$0xff]
        %v593 = vld [vmem:[%s168 + $0xc48] sm:$0xff]
        %v594 = vld [vmem:[%s168 + $0xc50] sm:$0xff]
        %v595 = vld [vmem:[%s168 + $0xc58] sm:$0xff]
        %v596 = vld [vmem:[%s168 + $0xc60] sm:$0xff]
        %v597 = vld [vmem:[%s168 + $0xc68] sm:$0xff]
        %v598 = vld [vmem:[%s168 + $0xc70] sm:$0xff]
        %v599 = vld [vmem:[%s168 + $0xc78] sm:$0xff]
        %v600 = vld [vmem:[%s168 + $0xc80] sm:$0xff]
        %v601 = vld [vmem:[%s168 + $0xc88] sm:$0xff]
        %v602 = vld [vmem:[%s168 + $0xc90] sm:$0xff]
        %v603 = vld [vmem:[%s168 + $0xc98] sm:$0xff]
        %v604 = vld [vmem:[%s168 + $0xca0] sm:$0xff]
        %v605 = vld [vmem:[%s168 + $0xca8] sm:$0xff]
        %v606 = vld [vmem:[%s168 + $0xcb0] sm:$0xff]
        %v607 = vld [vmem:[%s168 + $0xcb8] sm:$0xff]
        %v608 = vld [vmem:[%s168 + $0xcc0] sm:$0xff]
        %v609 = vld [vmem:[%s168 + $0xcc8] sm:$0xff]
        %v610 = vld [vmem:[%s168 + $0xcd0] sm:$0xff]
        %v611 = vld [vmem:[%s168 + $0xcd8] sm:$0xff]
        %v612 = vld [vmem:[%s168 + $0xce0] sm:$0xff]
        %v613 = vld [vmem:[%s168 + $0xce8] sm:$0xff]
        %v614 = vld [vmem:[%s168 + $0xcf0] sm:$0xff]
        %v615 = vld [vmem:[%s168 + $0xcf8] sm:$0xff]
        %v616 = vld [vmem:[%s168 + $0xd00] sm:$0xff]
        %v617 = vld [vmem:[%s168 + $0xd08] sm:$0xff]
        %v618 = vld [vmem:[%s168 + $0xd10] sm:$0xff]
        %v619 = vld [vmem:[%s168 + $0xd18] sm:$0xff]
        %v620 = vld [vmem:[%s168 + $0xd20] sm:$0xff]
        %v621 = vld [vmem:[%s168 + $0xd28] sm:$0xff]
        %v622 = vld [vmem:[%s168 + $0xd30] sm:$0xff]
        %v623 = vld [vmem:[%s168 + $0xd38] sm:$0xff]
        %v624 = vld [vmem:[%s168 + $0xd40] sm:$0xff]
        %v625 = vld [vmem:[%s168 + $0xd48] sm:$0xff]
        %v626 = vld [vmem:[%s168 + $0xd50] sm:$0xff]
        %v627 = vld [vmem:[%s168 + $0xd58] sm:$0xff]
        %v628 = vld [vmem:[%s168 + $0xd60] sm:$0xff]
        %v629 = vld [vmem:[%s168 + $0xd68] sm:$0xff]
        %v630 = vld [vmem:[%s168 + $0xd70] sm:$0xff]
        %v631 = vld [vmem:[%s168 + $0xd78] sm:$0xff]
        %v632 = vld [vmem:[%s168 + $0xd80] sm:$0xff]
        %v633 = vld [vmem:[%s168 + $0xd88] sm:$0xff]
        %v634 = vld [vmem:[%s168 + $0xd90] sm:$0xff]
        %v635 = vld [vmem:[%s168 + $0xd98] sm:$0xff]
        %v636 = vld [vmem:[%s168 + $0xda0] sm:$0xff]
        %v637 = vld [vmem:[%s168 + $0xda8] sm:$0xff]
        %v638 = vld [vmem:[%s168 + $0xdb0] sm:$0xff]
        %v639 = vld [vmem:[%s168 + $0xdb8] sm:$0xff]
        %v640 = vld [vmem:[%s168 + $0xdc0] sm:$0xff]
        %v641 = vld [vmem:[%s168 + $0xdc8] sm:$0xff]
        %v642 = vld [vmem:[%s168 + $0xdd0] sm:$0xff]
        %v643 = vld [vmem:[%s168 + $0xdd8] sm:$0xff]
        %v644 = vld [vmem:[%s168 + $0xde0] sm:$0xff]
        %v645 = vld [vmem:[%s168 + $0xde8] sm:$0xff]
        %v646 = vld [vmem:[%s168 + $0xdf0] sm:$0xff]
        %v647 = vld [vmem:[%s168 + $0xdf8] sm:$0xff]
        %v648 = vld [vmem:[%s168 + $0xe00] sm:$0xff]
        %v649 = vld [vmem:[%s168 + $0xe08] sm:$0xff]
        %v650 = vld [vmem:[%s168 + $0xe10] sm:$0xff]
        %v651 = vld [vmem:[%s168 + $0xe18] sm:$0xff]
        %v652 = vld [vmem:[%s168 + $0xe20] sm:$0xff]
        %v653 = vld [vmem:[%s168 + $0xe28] sm:$0xff]
        %v654 = vld [vmem:[%s168 + $0xe30] sm:$0xff]
        %v655 = vld [vmem:[%s168 + $0xe38] sm:$0xff]
        %v656 = vld [vmem:[%s168 + $0xe40] sm:$0xff]
        %v657 = vld [vmem:[%s168 + $0xe48] sm:$0xff]
        %v658 = vld [vmem:[%s168 + $0xe50] sm:$0xff]
        %v659 = vld [vmem:[%s168 + $0xe58] sm:$0xff]
        %v660 = vld [vmem:[%s168 + $0xe60] sm:$0xff]
        %v661 = vld [vmem:[%s168 + $0xe68] sm:$0xff]
        %v662 = vld [vmem:[%s168 + $0xe70] sm:$0xff]
        %v663 = vld [vmem:[%s168 + $0xe78] sm:$0xff]
        %v664 = vld [vmem:[%s168 + $0xe80] sm:$0xff]
        %v665 = vld [vmem:[%s168 + $0xe88] sm:$0xff]
        %v666 = vld [vmem:[%s168 + $0xe90] sm:$0xff]
        %v667 = vld [vmem:[%s168 + $0xe98] sm:$0xff]
        %v668 = vld [vmem:[%s168 + $0xea0] sm:$0xff]
        %v669 = vld [vmem:[%s168 + $0xea8] sm:$0xff]
        %v670 = vld [vmem:[%s168 + $0xeb0] sm:$0xff]
        %v671 = vld [vmem:[%s168 + $0xeb8] sm:$0xff]
        %v672 = vld [vmem:[%s168 + $0xec0] sm:$0xff]
        %v673 = vld [vmem:[%s168 + $0xec8] sm:$0xff]
        %v674 = vld [vmem:[%s168 + $0xed0] sm:$0xff]
        %v675 = vld [vmem:[%s168 + $0xed8] sm:$0xff]
        %v676 = vld [vmem:[%s168 + $0xee0] sm:$0xff]
        %v677 = vld [vmem:[%s168 + $0xee8] sm:$0xff]
        %v678 = vld [vmem:[%s168 + $0xef0] sm:$0xff]
        %v679 = vld [vmem:[%s168 + $0xef8] sm:$0xff]
        %v680 = vld [vmem:[%s168 + $0xf00] sm:$0xff]
        %v681 = vld [vmem:[%s168 + $0xf08] sm:$0xff]
        %v682 = vld [vmem:[%s168 + $0xf10] sm:$0xff]
        %v683 = vld [vmem:[%s168 + $0xf18] sm:$0xff]
        %v684 = vld [vmem:[%s168 + $0xf20] sm:$0xff]
        %v685 = vld [vmem:[%s168 + $0xf28] sm:$0xff]
        %v686 = vld [vmem:[%s168 + $0xf30] sm:$0xff]
        %v687 = vld [vmem:[%s168 + $0xf38] sm:$0xff]
        %v688 = vld [vmem:[%s168 + $0xf40] sm:$0xff]
        %v689 = vld [vmem:[%s168 + $0xf48] sm:$0xff]
        %v690 = vld [vmem:[%s168 + $0xf50] sm:$0xff]
        %v691 = vld [vmem:[%s168 + $0xf58] sm:$0xff]
        %v692 = vld [vmem:[%s168 + $0xf60] sm:$0xff]
        %v693 = vld [vmem:[%s168 + $0xf68] sm:$0xff]
        %v694 = vld [vmem:[%s168 + $0xf70] sm:$0xff]
        %v695 = vld [vmem:[%s168 + $0xf78] sm:$0xff]
        %v696 = vld [vmem:[%s168 + $0xf80] sm:$0xff]
        %v697 = vld [vmem:[%s168 + $0xf88] sm:$0xff]
        %v698 = vld [vmem:[%s168 + $0xf90] sm:$0xff]
        %v699 = vld [vmem:[%s168 + $0xf98] sm:$0xff]
        %v700 = vld [vmem:[%s168 + $0xfa0] sm:$0xff]
        %v701 = vld [vmem:[%s168 + $0xfa8] sm:$0xff]
        %v702 = vld [vmem:[%s168 + $0xfb0] sm:$0xff]
        %v703 = vld [vmem:[%s168 + $0xfb8] sm:$0xff]
        %v704 = vld [vmem:[%s168 + $0xfc0] sm:$0xff]
        %v705 = vld [vmem:[%s168 + $0xfc8] sm:$0xff]
        %v706 = vld [vmem:[%s168 + $0xfd0] sm:$0xff]
        %v707 = vld [vmem:[%s168 + $0xfd8] sm:$0xff]
        %v708 = vld [vmem:[%s168 + $0xfe0] sm:$0xff]
        %v709 = vld [vmem:[%s168 + $0xfe8] sm:$0xff]
        %v710 = vld [vmem:[%s168 + $0xff0] sm:$0xff]
        %v711 = vld [vmem:[%s168 + $0xff8] sm:$0xff]
        %v712 = vld [vmem:[#allocation6] sm:$0xff]
        %v713 = vld [vmem:[#allocation6 + $0x8] sm:$0xff]
        %v714 = vld [vmem:[#allocation6 + $0x10] sm:$0xff]
        %v715 = vld [vmem:[#allocation6 + $0x18] sm:$0xff]
        %v716 = vld [vmem:[#allocation6 + $0x20] sm:$0xff]
        %v717 = vld [vmem:[#allocation6 + $0x28] sm:$0xff]
        %v718 = vld [vmem:[#allocation6 + $0x30] sm:$0xff]
        %v719 = vld [vmem:[#allocation6 + $0x38] sm:$0xff]
        %v720 = vld [vmem:[#allocation6 + $0x40] sm:$0xff]
        %v721 = vld [vmem:[#allocation6 + $0x48] sm:$0xff]
        %v722 = vld [vmem:[#allocation6 + $0x50] sm:$0xff]
        %v723 = vld [vmem:[#allocation6 + $0x58] sm:$0xff]
        %v724 = vld [vmem:[#allocation6 + $0x60] sm:$0xff]
        %v725 = vld [vmem:[#allocation6 + $0x68] sm:$0xff]
        %v726 = vld [vmem:[#allocation6 + $0x70] sm:$0xff]
        %v727 = vld [vmem:[#allocation6 + $0x78] sm:$0xff]
        %v728 = vld [vmem:[#allocation6 + $0x80] sm:$0xff]
        %v729 = vld [vmem:[#allocation6 + $0x88] sm:$0xff]
        %v730 = vld [vmem:[#allocation6 + $0x90] sm:$0xff]
        %v731 = vld [vmem:[#allocation6 + $0x98] sm:$0xff]
        %v732 = vld [vmem:[#allocation6 + $0xa0] sm:$0xff]
        %v733 = vld [vmem:[#allocation6 + $0xa8] sm:$0xff]
        %v734 = vld [vmem:[#allocation6 + $0xb0] sm:$0xff]
        %v735 = vld [vmem:[#allocation6 + $0xb8] sm:$0xff]
        %v736 = vld [vmem:[#allocation6 + $0xc0] sm:$0xff]
        %v737 = vld [vmem:[#allocation6 + $0xc8] sm:$0xff]
        %v738 = vld [vmem:[#allocation6 + $0xd0] sm:$0xff]
        %v739 = vld [vmem:[#allocation6 + $0xd8] sm:$0xff]
        %v740 = vld [vmem:[#allocation6 + $0xe0] sm:$0xff]
        %v741 = vld [vmem:[#allocation6 + $0xe8] sm:$0xff]
        %v742 = vld [vmem:[#allocation6 + $0xf0] sm:$0xff]
        %v743 = vld [vmem:[#allocation6 + $0xf8] sm:$0xff]
        %v744 = vld [vmem:[#allocation6 + $0x100] sm:$0xff]
        %v745 = vld [vmem:[#allocation6 + $0x108] sm:$0xff]
        %v746 = vld [vmem:[#allocation6 + $0x110] sm:$0xff]
        %v747 = vld [vmem:[#allocation6 + $0x118] sm:$0xff]
        %v748 = vld [vmem:[#allocation6 + $0x120] sm:$0xff]
        %v749 = vld [vmem:[#allocation6 + $0x128] sm:$0xff]
        %v750 = vld [vmem:[#allocation6 + $0x130] sm:$0xff]
        %v751 = vld [vmem:[#allocation6 + $0x138] sm:$0xff]
        %v752 = vld [vmem:[#allocation6 + $0x140] sm:$0xff]
        %v753 = vld [vmem:[#allocation6 + $0x148] sm:$0xff]
        %v754 = vld [vmem:[#allocation6 + $0x150] sm:$0xff]
        %v755 = vld [vmem:[#allocation6 + $0x158] sm:$0xff]
        %v756 = vld [vmem:[#allocation6 + $0x160] sm:$0xff]
        %v757 = vld [vmem:[#allocation6 + $0x168] sm:$0xff]
        %v758 = vld [vmem:[#allocation6 + $0x170] sm:$0xff]
        %v759 = vld [vmem:[#allocation6 + $0x178] sm:$0xff]
        %v760 = vld [vmem:[#allocation6 + $0x180] sm:$0xff]
        %v761 = vld [vmem:[#allocation6 + $0x188] sm:$0xff]
        %v762 = vld [vmem:[#allocation6 + $0x190] sm:$0xff]
        %v763 = vld [vmem:[#allocation6 + $0x198] sm:$0xff]
        %v764 = vld [vmem:[#allocation6 + $0x1a0] sm:$0xff]
        %v765 = vld [vmem:[#allocation6 + $0x1a8] sm:$0xff]
        %v766 = vld [vmem:[#allocation6 + $0x1b0] sm:$0xff]
        %v767 = vld [vmem:[#allocation6 + $0x1b8] sm:$0xff]
        %v768 = vld [vmem:[#allocation6 + $0x1c0] sm:$0xff]
        %v769 = vld [vmem:[#allocation6 + $0x1c8] sm:$0xff]
        %v770 = vld [vmem:[#allocation6 + $0x1d0] sm:$0xff]
        %v771 = vld [vmem:[#allocation6 + $0x1d8] sm:$0xff]
        %v772 = vld [vmem:[#allocation6 + $0x1e0] sm:$0xff]
        %v773 = vld [vmem:[#allocation6 + $0x1e8] sm:$0xff]
        %v774 = vld [vmem:[#allocation6 + $0x1f0] sm:$0xff]
        %v775 = vld [vmem:[#allocation6 + $0x1f8] sm:$0xff]
        %v776 = vld [vmem:[#allocation6 + $0x200] sm:$0xff]
        %v777 = vld [vmem:[#allocation6 + $0x208] sm:$0xff]
        %v778 = vld [vmem:[#allocation6 + $0x210] sm:$0xff]
        %v779 = vld [vmem:[#allocation6 + $0x218] sm:$0xff]
        %v780 = vld [vmem:[#allocation6 + $0x220] sm:$0xff]
        %v781 = vld [vmem:[#allocation6 + $0x228] sm:$0xff]
        %v782 = vld [vmem:[#allocation6 + $0x230] sm:$0xff]
        %v783 = vld [vmem:[#allocation6 + $0x238] sm:$0xff]
        %v784 = vld [vmem:[#allocation6 + $0x240] sm:$0xff]
        %v785 = vld [vmem:[#allocation6 + $0x248] sm:$0xff]
        %v786 = vld [vmem:[#allocation6 + $0x250] sm:$0xff]
        %v787 = vld [vmem:[#allocation6 + $0x258] sm:$0xff]
        %v788 = vld [vmem:[#allocation6 + $0x260] sm:$0xff]
        %v789 = vld [vmem:[#allocation6 + $0x268] sm:$0xff]
        %v790 = vld [vmem:[#allocation6 + $0x270] sm:$0xff]
        %v791 = vld [vmem:[#allocation6 + $0x278] sm:$0xff]
        %v792 = vld [vmem:[#allocation6 + $0x280] sm:$0xff]
        %v793 = vld [vmem:[#allocation6 + $0x288] sm:$0xff]
        %v794 = vld [vmem:[#allocation6 + $0x290] sm:$0xff]
        %v795 = vld [vmem:[#allocation6 + $0x298] sm:$0xff]
        %v796 = vld [vmem:[#allocation6 + $0x2a0] sm:$0xff]
        %v797 = vld [vmem:[#allocation6 + $0x2a8] sm:$0xff]
        %v798 = vld [vmem:[#allocation6 + $0x2b0] sm:$0xff]
        %v799 = vld [vmem:[#allocation6 + $0x2b8] sm:$0xff]
        %v800 = vld [vmem:[#allocation6 + $0x2c0] sm:$0xff]
        %v801 = vld [vmem:[#allocation6 + $0x2c8] sm:$0xff]
        %v802 = vld [vmem:[#allocation6 + $0x2d0] sm:$0xff]
        %v803 = vld [vmem:[#allocation6 + $0x2d8] sm:$0xff]
        %v804 = vld [vmem:[#allocation6 + $0x2e0] sm:$0xff]
        %v805 = vld [vmem:[#allocation6 + $0x2e8] sm:$0xff]
        %v806 = vld [vmem:[#allocation6 + $0x2f0] sm:$0xff]
        %v807 = vld [vmem:[#allocation6 + $0x2f8] sm:$0xff]
        %v808 = vld [vmem:[#allocation6 + $0x300] sm:$0xff]
        %v809 = vld [vmem:[#allocation6 + $0x308] sm:$0xff]
        %v810 = vld [vmem:[#allocation6 + $0x310] sm:$0xff]
        %v811 = vld [vmem:[#allocation6 + $0x318] sm:$0xff]
        %v812 = vld [vmem:[#allocation6 + $0x320] sm:$0xff]
        %v813 = vld [vmem:[#allocation6 + $0x328] sm:$0xff]
        %v814 = vld [vmem:[#allocation6 + $0x330] sm:$0xff]
        %v815 = vld [vmem:[#allocation6 + $0x338] sm:$0xff]
        %v816 = vld [vmem:[#allocation6 + $0x340] sm:$0xff]
        %v817 = vld [vmem:[#allocation6 + $0x348] sm:$0xff]
        %v818 = vld [vmem:[#allocation6 + $0x350] sm:$0xff]
        %v819 = vld [vmem:[#allocation6 + $0x358] sm:$0xff]
        %v820 = vld [vmem:[#allocation6 + $0x360] sm:$0xff]
        %v821 = vld [vmem:[#allocation6 + $0x368] sm:$0xff]
        %v822 = vld [vmem:[#allocation6 + $0x370] sm:$0xff]
        %v823 = vld [vmem:[#allocation6 + $0x378] sm:$0xff]
        %v824 = vld [vmem:[#allocation6 + $0x380] sm:$0xff]
        %v825 = vld [vmem:[#allocation6 + $0x388] sm:$0xff]
        %v826 = vld [vmem:[#allocation6 + $0x390] sm:$0xff]
        %v827 = vld [vmem:[#allocation6 + $0x398] sm:$0xff]
        %v828 = vld [vmem:[#allocation6 + $0x3a0] sm:$0xff]
        %v829 = vld [vmem:[#allocation6 + $0x3a8] sm:$0xff]
        %v830 = vld [vmem:[#allocation6 + $0x3b0] sm:$0xff]
        %v831 = vld [vmem:[#allocation6 + $0x3b8] sm:$0xff]
        %v832 = vld [vmem:[#allocation6 + $0x3c0] sm:$0xff]
        %v833 = vld [vmem:[#allocation6 + $0x3c8] sm:$0xff]
        %v834 = vld [vmem:[#allocation6 + $0x3d0] sm:$0xff]
        %v835 = vld [vmem:[#allocation6 + $0x3d8] sm:$0xff]
        %v836 = vld [vmem:[#allocation6 + $0x3e0] sm:$0xff]
        %v837 = vld [vmem:[#allocation6 + $0x3e8] sm:$0xff]
        %v838 = vld [vmem:[#allocation6 + $0x3f0] sm:$0xff]
        %v839 = vld [vmem:[#allocation6 + $0x3f8] sm:$0xff]
        %840 = vmatprep.subr.mxu0 0.0
        %841 = vmatpush1.msra.mxu0 %v712
        %842 = vmatprep.subr.mxu0 0.0
        %843 = vmatpush1.msra.mxu0 %v713
        %844 = vmatprep.subr.mxu0 0.0
        %845 = vmatpush1.msra.mxu0 %v714
        %846 = vmatprep.subr.mxu0 0.0
        %847 = vmatpush1.msra.mxu0 %v715
        %848 = vmatprep.subr.mxu0 0.0
        %849 = vmatpush1.msra.mxu0 %v716
        %850 = vmatprep.subr.mxu0 0.0
        %851 = vmatpush1.msra.mxu0 %v717
        %852 = vmatprep.subr.mxu0 0.0
        %853 = vmatpush1.msra.mxu0 %v718
        %854 = vmatprep.subr.mxu0 0.0
        %855 = vmatpush1.msra.mxu0 %v719
        %856 = vmatprep.subr.mxu0 0.0
        %857 = vmatpush1.msra.mxu0 %v720
        %858 = vmatprep.subr.mxu0 0.0
        %859 = vmatpush1.msra.mxu0 %v721
        %860 = vmatprep.subr.mxu0 0.0
        %861 = vmatpush1.msra.mxu0 %v722
        %862 = vmatprep.subr.mxu0 0.0
        %863 = vmatpush1.msra.mxu0 %v723
        %864 = vmatprep.subr.mxu0 0.0
        %865 = vmatpush1.msra.mxu0 %v724
        %866 = vmatprep.subr.mxu0 0.0
        %867 = vmatpush1.msra.mxu0 %v725
        %868 = vmatprep.subr.mxu0 0.0
        %869 = vmatpush1.msra.mxu0 %v726
        %870 = vmatprep.subr.mxu0 0.0
        %871 = vmatpush1.msra.mxu0 %v727
        %872 = vmatprep.subr.mxu0 0.0
        %873 = vmatpush1.msra.mxu0 %v728
        %874 = vmatprep.subr.mxu0 0.0
        %875 = vmatpush1.msra.mxu0 %v729
        %876 = vmatprep.subr.mxu0 0.0
        %877 = vmatpush1.msra.mxu0 %v730
        %878 = vmatprep.subr.mxu0 0.0
        %879 = vmatpush1.msra.mxu0 %v731
        %880 = vmatprep.subr.mxu0 0.0
        %881 = vmatpush1.msra.mxu0 %v732
        %882 = vmatprep.subr.mxu0 0.0
        %883 = vmatpush1.msra.mxu0 %v733
        %884 = vmatprep.subr.mxu0 0.0
        %885 = vmatpush1.msra.mxu0 %v734
        %886 = vmatprep.subr.mxu0 0.0
        %887 = vmatpush1.msra.mxu0 %v735
        %888 = vmatprep.subr.mxu0 0.0
        %889 = vmatpush1.msra.mxu0 %v736
        %890 = vmatprep.subr.mxu0 0.0
        %891 = vmatpush1.msra.mxu0 %v737
        %892 = vmatprep.subr.mxu0 0.0
        %893 = vmatpush1.msra.mxu0 %v738
        %894 = vmatprep.subr.mxu0 0.0
        %895 = vmatpush1.msra.mxu0 %v739
        %896 = vmatprep.subr.mxu0 0.0
        %897 = vmatpush1.msra.mxu0 %v740
        %898 = vmatprep.subr.mxu0 0.0
        %899 = vmatpush1.msra.mxu0 %v741
        %900 = vmatprep.subr.mxu0 0.0
        %901 = vmatpush1.msra.mxu0 %v742
        %902 = vmatprep.subr.mxu0 0.0
        %903 = vmatpush1.msra.mxu0 %v743
        %904 = vmatprep.mubr.f32.mxu0 %v201
        %905 = vmatmul.mubr.f32.gmra.mrb[0].mxu0 %v200
        %v906 = vpop.f32.mrb[0].mxu0
        %v907 = vadd.f32 0.0, %v906
        %v908 = vpop.f32.mrb[0].mxu0
        %909 = vmatprep.mubr.f32.mxu0 %v209
        %910 = vmatmul.mubr.f32.gmra.mrb[0].mxu0 %v208
        %v911 = vpop.f32.mrb[0].mxu0
        %v912 = vadd.f32 0.0, %v911
        %v913 = vpop.f32.mrb[0].mxu0
        %914 = vmatprep.mubr.f32.mxu0 %v217
        %915 = vmatmul.mubr.f32.gmra.mrb[0].mxu0 %v216
        %v916 = vpop.f32.mrb[0].mxu0
        %v917 = vadd.f32 0.0, %v916
        %v918 = vpop.f32.mrb[0].mxu0
        %919 = vmatprep.mubr.f32.mxu0 %v225
        %920 = vmatmul.mubr.f32.gmra.mrb[0].mxu0 %v224
        %v921 = vpop.f32.mrb[0].mxu0
        %v922 = vadd.f32 0.0, %v921
        %v923 = vpop.f32.mrb[0].mxu0
        %924 = vmatprep.mubr.f32.mxu0 %v233
        %925 = vmatmul.mubr.f32.gmra.mrb[0].mxu0 %v232
        %v926 = vpop.f32.mrb[0].mxu0
        %v927 = vadd.f32 0.0, %v926
        %v928 = vpop.f32.mrb[0].mxu0
        %929 = vmatprep.mubr.f32.mxu0 %v241
        %930 = vmatmul.mubr.f32.gmra.mrb[0].mxu0 %v240
        %v931 = vpop.f32.mrb[0].mxu0
        %v932 = vadd.f32 0.0, %v931
        %v933 = vpop.f32.mrb[0].mxu0
        %934 = vmatprep.mubr.f32.mxu0 %v249
        %935 = vmatmul.mubr.f32.gmra.mrb[0].mxu0 %v248
        %v936 = vpop.f32.mrb[0].mxu0
        %v937 = vadd.f32 0.0, %v936
        %v938 = vpop.f32.mrb[0].mxu0
        %939 = vmatprep.mubr.f32.mxu0 %v257
        %940 = vmatmul.mubr.f32.gmra.mrb[0].mxu0 %v256
        %v941 = vpop.f32.mrb[0].mxu0
        %v942 = vadd.f32 0.0, %v941
        %v943 = vpop.f32.mrb[0].mxu0
        %944 = vmatprep.mubr.f32.mxu0 %v265
        %945 = vmatmul.mubr.f32.gmra.mrb[0].mxu0 %v264
        %v946 = vpop.f32.mrb[0].mxu0
        %v947 = vadd.f32 0.0, %v946
        %v948 = vpop.f32.mrb[0].mxu0
        %949 = vmatprep.mubr.f32.mxu0 %v273
        %950 = vmatmul.mubr.f32.gmra.mrb[0].mxu0 %v272
        %v951 = vpop.f32.mrb[0].mxu0
        %v952 = vadd.f32 0.0, %v951
        %v953 = vpop.f32.mrb[0].mxu0
        %954 = vmatprep.mubr.f32.mxu0 %v281
        %955 = vmatmul.mubr.f32.gmra.mrb[0].mxu0 %v280
        %v956 = vpop.f32.mrb[0].mxu0
        %v957 = vadd.f32 0.0, %v956
        %v958 = vpop.f32.mrb[0].mxu0
        %959 = vmatprep.mubr.f32.mxu0 %v289
        %960 = vmatmul.mubr.f32.gmra.mrb[0].mxu0 %v288
        %v961 = vpop.f32.mrb[0].mxu0
        %v962 = vadd.f32 0.0, %v961
        %v963 = vpop.f32.mrb[0].mxu0
        %964 = vmatprep.mubr.f32.mxu0 %v297
        %965 = vmatmul.mubr.f32.gmra.mrb[0].mxu0 %v296
        %v966 = vpop.f32.mrb[0].mxu0
        %v967 = vadd.f32 0.0, %v966
        %v968 = vpop.f32.mrb[0].mxu0
        %969 = vmatprep.mubr.f32.mxu0 %v305
        %970 = vmatmul.mubr.f32.gmra.mrb[0].mxu0 %v304
        %v971 = vpop.f32.mrb[0].mxu0
        %v972 = vadd.f32 0.0, %v971
        %v973 = vpop.f32.mrb[0].mxu0
        %974 = vmatprep.mubr.f32.mxu0 %v313
        %975 = vmatmul.mubr.f32.gmra.mrb[0].mxu0 %v312
        %v976 = vpop.f32.mrb[0].mxu0
        %v977 = vadd.f32 0.0, %v976
        %v978 = vpop.f32.mrb[0].mxu0
        %979 = vmatprep.mubr.f32.mxu0 %v321
        %980 = vmatmul.mubr.f32.gmra.mrb[0].mxu0 %v320
        %v981 = vpop.f32.mrb[0].mxu0
        %v982 = vadd.f32 0.0, %v981
        %v983 = vpop.f32.mrb[0].mxu0
        %984 = vmatprep.mubr.f32.mxu0 %v329
        %985 = vmatmul.mubr.f32.gmra.mrb[0].mxu0 %v328
        %v986 = vpop.f32.mrb[0].mxu0
        %v987 = vadd.f32 0.0, %v986
        %v988 = vpop.f32.mrb[0].mxu0
        %989 = vmatprep.mubr.f32.mxu0 %v337
        %990 = vmatmul.mubr.f32.gmra.mrb[0].mxu0 %v336
        %v991 = vpop.f32.mrb[0].mxu0
        %v992 = vadd.f32 0.0, %v991
        %v993 = vpop.f32.mrb[0].mxu0
        %994 = vmatprep.mubr.f32.mxu0 %v345
        %995 = vmatmul.mubr.f32.gmra.mrb[0].mxu0 %v344
        %v996 = vpop.f32.mrb[0].mxu0
        %v997 = vadd.f32 0.0, %v996
        %v998 = vpop.f32.mrb[0].mxu0
        %999 = vmatprep.mubr.f32.mxu0 %v353
        %1000 = vmatmul.mubr.f32.gmra.mrb[0].mxu0 %v352
        %v1001 = vpop.f32.mrb[0].mxu0
        %v1002 = vadd.f32 0.0, %v1001
        %v1003 = vpop.f32.mrb[0].mxu0
        %1004 = vmatprep.mubr.f32.mxu0 %v361
        %1005 = vmatmul.mubr.f32.gmra.mrb[0].mxu0 %v360
        %v1006 = vpop.f32.mrb[0].mxu0
        %v1007 = vadd.f32 0.0, %v1006
        %v1008 = vpop.f32.mrb[0].mxu0
        %1009 = vmatprep.mubr.f32.mxu0 %v369
        %1010 = vmatmul.mubr.f32.gmra.mrb[0].mxu0 %v368
        %v1011 = vpop.f32.mrb[0].mxu0
        %v1012 = vadd.f32 0.0, %v1011
        %v1013 = vpop.f32.mrb[0].mxu0
        %1014 = vmatprep.mubr.f32.mxu0 %v377
        %1015 = vmatmul.mubr.f32.gmra.mrb[0].mxu0 %v376
        %v1016 = vpop.f32.mrb[0].mxu0
        %v1017 = vadd.f32 0.0, %v1016
        %v1018 = vpop.f32.mrb[0].mxu0
        %1019 = vmatprep.mubr.f32.mxu0 %v385
        %1020 = vmatmul.mubr.f32.gmra.mrb[0].mxu0 %v384
        %v1021 = vpop.f32.mrb[0].mxu0
        %v1022 = vadd.f32 0.0, %v1021
        %v1023 = vpop.f32.mrb[0].mxu0
        %1024 = vmatprep.mubr.f32.mxu0 %v393
        %1025 = vmatmul.mubr.f32.gmra.mrb[0].mxu0 %v392
        %v1026 = vpop.f32.mrb[0].mxu0
        %v1027 = vadd.f32 0.0, %v1026
        %v1028 = vpop.f32.mrb[0].mxu0
        %1029 = vmatprep.mubr.f32.mxu0 %v401
        %1030 = vmatmul.mubr.f32.gmra.mrb[0].mxu0 %v400
        %v1031 = vpop.f32.mrb[0].mxu0
        %v1032 = vadd.f32 0.0, %v1031
        %v1033 = vpop.f32.mrb[0].mxu0
        %1034 = vmatprep.mubr.f32.mxu0 %v409
        %1035 = vmatmul.mubr.f32.gmra.mrb[0].mxu0 %v408
        %v1036 = vpop.f32.mrb[0].mxu0
        %v1037 = vadd.f32 0.0, %v1036
        %v1038 = vpop.f32.mrb[0].mxu0
        %1039 = vmatprep.mubr.f32.mxu0 %v417
        %1040 = vmatmul.mubr.f32.gmra.mrb[0].mxu0 %v416
        %v1041 = vpop.f32.mrb[0].mxu0
        %v1042 = vadd.f32 0.0, %v1041
        %v1043 = vpop.f32.mrb[0].mxu0
        %1044 = vmatprep.mubr.f32.mxu0 %v425
        %1045 = vmatmul.mubr.f32.gmra.mrb[0].mxu0 %v424
        %v1046 = vpop.f32.mrb[0].mxu0
        %v1047 = vadd.f32 0.0, %v1046
        %v1048 = vpop.f32.mrb[0].mxu0
        %1049 = vmatprep.mubr.f32.mxu0 %v433
        %1050 = vmatmul.mubr.f32.gmra.mrb[0].mxu0 %v432
        %v1051 = vpop.f32.mrb[0].mxu0
        %v1052 = vadd.f32 0.0, %v1051
        %v1053 = vpop.f32.mrb[0].mxu0
        %1054 = vmatprep.mubr.f32.mxu0 %v441
        %1055 = vmatmul.mubr.f32.gmra.mrb[0].mxu0 %v440
        %v1056 = vpop.f32.mrb[0].mxu0
        %v1057 = vadd.f32 0.0, %v1056
        %v1058 = vpop.f32.mrb[0].mxu0
        %1059 = vmatprep.mubr.f32.mxu0 %v449
        %1060 = vmatmul.mubr.f32.gmra.mrb[0].mxu0 %v448
        %v1061 = vpop.f32.mrb[0].mxu0
        %v1062 = vadd.f32 0.0, %v1061
        %v1063 = vpop.f32.mrb[0].mxu0
        %1064 = vmatprep.mubr.f32.mxu0 %v457
        %1065 = vmatmul.mubr.f32.gmra.mrb[0].mxu0 %v456
        %v1066 = vpop.f32.mrb[0].mxu0
        %v1067 = vadd.f32 0.0, %v1066
        %v1068 = vpop.f32.mrb[0].mxu0
        %1069 = vmatprep.mubr.f32.mxu0 %v465
        %1070 = vmatmul.mubr.f32.gmra.mrb[0].mxu0 %v464
        %v1071 = vpop.f32.mrb[0].mxu0
        %v1072 = vadd.f32 0.0, %v1071
        %v1073 = vpop.f32.mrb[0].mxu0
        %1074 = vmatprep.mubr.f32.mxu0 %v473
        %1075 = vmatmul.mubr.f32.gmra.mrb[0].mxu0 %v472
        %v1076 = vpop.f32.mrb[0].mxu0
        %v1077 = vadd.f32 0.0, %v1076
        %v1078 = vpop.f32.mrb[0].mxu0
        %1079 = vmatprep.mubr.f32.mxu0 %v481
        %1080 = vmatmul.mubr.f32.gmra.mrb[0].mxu0 %v480
        %v1081 = vpop.f32.mrb[0].mxu0
        %v1082 = vadd.f32 0.0, %v1081
        %v1083 = vpop.f32.mrb[0].mxu0
        %1084 = vmatprep.mubr.f32.mxu0 %v489
        %1085 = vmatmul.mubr.f32.gmra.mrb[0].mxu0 %v488
        %v1086 = vpop.f32.mrb[0].mxu0
        %v1087 = vadd.f32 0.0, %v1086
        %v1088 = vpop.f32.mrb[0].mxu0
        %1089 = vmatprep.mubr.f32.mxu0 %v497
        %1090 = vmatmul.mubr.f32.gmra.mrb[0].mxu0 %v496
        %v1091 = vpop.f32.mrb[0].mxu0
        %v1092 = vadd.f32 0.0, %v1091
        %v1093 = vpop.f32.mrb[0].mxu0
        %1094 = vmatprep.mubr.f32.mxu0 %v505
        %1095 = vmatmul.mubr.f32.gmra.mrb[0].mxu0 %v504
        %v1096 = vpop.f32.mrb[0].mxu0
        %v1097 = vadd.f32 0.0, %v1096
        %v1098 = vpop.f32.mrb[0].mxu0
        %1099 = vmatprep.mubr.f32.mxu0 %v513
        %1100 = vmatmul.mubr.f32.gmra.mrb[0].mxu0 %v512
        %v1101 = vpop.f32.mrb[0].mxu0
        %v1102 = vadd.f32 0.0, %v1101
        %v1103 = vpop.f32.mrb[0].mxu0
        %1104 = vmatprep.mubr.f32.mxu0 %v521
        %1105 = vmatmul.mubr.f32.gmra.mrb[0].mxu0 %v520
        %v1106 = vpop.f32.mrb[0].mxu0
        %v1107 = vadd.f32 0.0, %v1106
        %v1108 = vpop.f32.mrb[0].mxu0
        %1109 = vmatprep.mubr.f32.mxu0 %v529
        %1110 = vmatmul.mubr.f32.gmra.mrb[0].mxu0 %v528
        %v1111 = vpop.f32.mrb[0].mxu0
        %v1112 = vadd.f32 0.0, %v1111
        %v1113 = vpop.f32.mrb[0].mxu0
        %1114 = vmatprep.mubr.f32.mxu0 %v537
        %1115 = vmatmul.mubr.f32.gmra.mrb[0].mxu0 %v536
        %v1116 = vpop.f32.mrb[0].mxu0
        %v1117 = vadd.f32 0.0, %v1116
        %v1118 = vpop.f32.mrb[0].mxu0
        %1119 = vmatprep.mubr.f32.mxu0 %v545
        %1120 = vmatmul.mubr.f32.gmra.mrb[0].mxu0 %v544
        %v1121 = vpop.f32.mrb[0].mxu0
        %v1122 = vadd.f32 0.0, %v1121
        %v1123 = vpop.f32.mrb[0].mxu0
        %1124 = vmatprep.mubr.f32.mxu0 %v553
        %1125 = vmatmul.mubr.f32.gmra.mrb[0].mxu0 %v552
        %v1126 = vpop.f32.mrb[0].mxu0
        %v1127 = vadd.f32 0.0, %v1126
        %v1128 = vpop.f32.mrb[0].mxu0
        %1129 = vmatprep.mubr.f32.mxu0 %v561
        %1130 = vmatmul.mubr.f32.gmra.mrb[0].mxu0 %v560
        %v1131 = vpop.f32.mrb[0].mxu0
        %v1132 = vadd.f32 0.0, %v1131
        %v1133 = vpop.f32.mrb[0].mxu0
        %1134 = vmatprep.mubr.f32.mxu0 %v569
        %1135 = vmatmul.mubr.f32.gmra.mrb[0].mxu0 %v568
        %v1136 = vpop.f32.mrb[0].mxu0
        %v1137 = vadd.f32 0.0, %v1136
        %v1138 = vpop.f32.mrb[0].mxu0
        %1139 = vmatprep.mubr.f32.mxu0 %v577
        %1140 = vmatmul.mubr.f32.gmra.mrb[0].mxu0 %v576
        %v1141 = vpop.f32.mrb[0].mxu0
        %v1142 = vadd.f32 0.0, %v1141
        %v1143 = vpop.f32.mrb[0].mxu0
        %1144 = vmatprep.mubr.f32.mxu0 %v585
        %1145 = vmatmul.mubr.f32.gmra.mrb[0].mxu0 %v584
        %v1146 = vpop.f32.mrb[0].mxu0
        %v1147 = vadd.f32 0.0, %v1146
        %v1148 = vpop.f32.mrb[0].mxu0
        %1149 = vmatprep.mubr.f32.mxu0 %v593
        %1150 = vmatmul.mubr.f32.gmra.mrb[0].mxu0 %v592
        %v1151 = vpop.f32.mrb[0].mxu0
        %v1152 = vadd.f32 0.0, %v1151
        %v1153 = vpop.f32.mrb[0].mxu0
        %1154 = vmatprep.mubr.f32.mxu0 %v601
        %1155 = vmatmul.mubr.f32.gmra.mrb[0].mxu0 %v600
        %v1156 = vpop.f32.mrb[0].mxu0
        %v1157 = vadd.f32 0.0, %v1156
        %v1158 = vpop.f32.mrb[0].mxu0
        %1159 = vmatprep.mubr.f32.mxu0 %v609
        %1160 = vmatmul.mubr.f32.gmra.mrb[0].mxu0 %v608
        %v1161 = vpop.f32.mrb[0].mxu0
        %v1162 = vadd.f32 0.0, %v1161
        %v1163 = vpop.f32.mrb[0].mxu0
        %1164 = vmatprep.mubr.f32.mxu0 %v617
        %1165 = vmatmul.mubr.f32.gmra.mrb[0].mxu0 %v616
        %v1166 = vpop.f32.mrb[0].mxu0
        %v1167 = vadd.f32 0.0, %v1166
        %v1168 = vpop.f32.mrb[0].mxu0
        %1169 = vmatprep.mubr.f32.mxu0 %v625
        %1170 = vmatmul.mubr.f32.gmra.mrb[0].mxu0 %v624
        %v1171 = vpop.f32.mrb[0].mxu0
        %v1172 = vadd.f32 0.0, %v1171
        %v1173 = vpop.f32.mrb[0].mxu0
        %1174 = vmatprep.mubr.f32.mxu0 %v633
        %1175 = vmatmul.mubr.f32.gmra.mrb[0].mxu0 %v632
        %v1176 = vpop.f32.mrb[0].mxu0
        %v1177 = vadd.f32 0.0, %v1176
        %v1178 = vpop.f32.mrb[0].mxu0
        %1179 = vmatprep.mubr.f32.mxu0 %v641
        %1180 = vmatmul.mubr.f32.gmra.mrb[0].mxu0 %v640
        %v1181 = vpop.f32.mrb[0].mxu0
        %v1182 = vadd.f32 0.0, %v1181
        %v1183 = vpop.f32.mrb[0].mxu0
        %1184 = vmatprep.mubr.f32.mxu0 %v649
        %1185 = vmatmul.mubr.f32.gmra.mrb[0].mxu0 %v648
        %v1186 = vpop.f32.mrb[0].mxu0
        %v1187 = vadd.f32 0.0, %v1186
        %v1188 = vpop.f32.mrb[0].mxu0
        %1189 = vmatprep.mubr.f32.mxu0 %v657
        %1190 = vmatmul.mubr.f32.gmra.mrb[0].mxu0 %v656
        %v1191 = vpop.f32.mrb[0].mxu0
        %v1192 = vadd.f32 0.0, %v1191
        %v1193 = vpop.f32.mrb[0].mxu0
        %1194 = vmatprep.mubr.f32.mxu0 %v665
        %1195 = vmatmul.mubr.f32.gmra.mrb[0].mxu0 %v664
        %v1196 = vpop.f32.mrb[0].mxu0
        %v1197 = vadd.f32 0.0, %v1196
        %v1198 = vpop.f32.mrb[0].mxu0
        %1199 = vmatprep.mubr.f32.mxu0 %v673
        %1200 = vmatmul.mubr.f32.gmra.mrb[0].mxu0 %v672
        %v1201 = vpop.f32.mrb[0].mxu0
        %v1202 = vadd.f32 0.0, %v1201
        %v1203 = vpop.f32.mrb[0].mxu0
        %1204 = vmatprep.mubr.f32.mxu0 %v681
        %1205 = vmatmul.mubr.f32.gmra.mrb[0].mxu0 %v680
        %v1206 = vpop.f32.mrb[0].mxu0
        %v1207 = vadd.f32 0.0, %v1206
        %v1208 = vpop.f32.mrb[0].mxu0
        %1209 = vmatprep.mubr.f32.mxu0 %v689
        %1210 = vmatmul.mubr.f32.gmra.mrb[0].mxu0 %v688
        %v1211 = vpop.f32.mrb[0].mxu0
        %v1212 = vadd.f32 0.0, %v1211
        %v1213 = vpop.f32.mrb[0].mxu0
        %1214 = vmatprep.mubr.f32.mxu0 %v697
        %1215 = vmatmul.mubr.f32.gmra.mrb[0].mxu0 %v696
        %v1216 = vpop.f32.mrb[0].mxu0
        %v1217 = vadd.f32 0.0, %v1216
        %v1218 = vpop.f32.mrb[0].mxu0
        %1219 = vmatprep.mubr.f32.mxu0 %v705
        %1220 = vmatmul.mubr.f32.gmra.mrb[0].mxu0 %v704
        %v1221 = vpop.f32.mrb[0].mxu0
        %v1222 = vadd.f32 0.0, %v1221
        %v1223 = vpop.f32.mrb[0].mxu0
        %1224 = vdwg.mxu0
        %1225 = vmatprep.subr.mxu0 0.0
        %1226 = vmatpush1.msra.mxu0 %v744
        %1227 = vmatprep.subr.mxu0 0.0
        %1228 = vmatpush1.msra.mxu0 %v745
        %1229 = vmatprep.subr.mxu0 0.0
        %1230 = vmatpush1.msra.mxu0 %v746
        %1231 = vmatprep.subr.mxu0 0.0
        %1232 = vmatpush1.msra.mxu0 %v747
        %1233 = vmatprep.subr.mxu0 0.0
        %1234 = vmatpush1.msra.mxu0 %v748
        %1235 = vmatprep.subr.mxu0 0.0
        %1236 = vmatpush1.msra.mxu0 %v749
        %1237 = vmatprep.subr.mxu0 0.0
        %1238 = vmatpush1.msra.mxu0 %v750
        %1239 = vmatprep.subr.mxu0 0.0
        %1240 = vmatpush1.msra.mxu0 %v751
        %1241 = vmatprep.subr.mxu0 0.0
        %1242 = vmatpush1.msra.mxu0 %v752
        %1243 = vmatprep.subr.mxu0 0.0
        %1244 = vmatpush1.msra.mxu0 %v753
        %1245 = vmatprep.subr.mxu0 0.0
        %1246 = vmatpush1.msra.mxu0 %v754
        %1247 = vmatprep.subr.mxu0 0.0
        %1248 = vmatpush1.msra.mxu0 %v755
        %1249 = vmatprep.subr.mxu0 0.0
        %1250 = vmatpush1.msra.mxu0 %v756
        %1251 = vmatprep.subr.mxu0 0.0
        %1252 = vmatpush1.msra.mxu0 %v757
        %1253 = vmatprep.subr.mxu0 0.0
        %1254 = vmatpush1.msra.mxu0 %v758
        %1255 = vmatprep.subr.mxu0 0.0
        %1256 = vmatpush1.msra.mxu0 %v759
        %1257 = vmatprep.subr.mxu0 0.0
        %1258 = vmatpush1.msra.mxu0 %v760
        %1259 = vmatprep.subr.mxu0 0.0
        %1260 = vmatpush1.msra.mxu0 %v761
        %1261 = vmatprep.subr.mxu0 0.0
        %1262 = vmatpush1.msra.mxu0 %v762
        %1263 = vmatprep.subr.mxu0 0.0
        %1264 = vmatpush1.msra.mxu0 %v763
        %1265 = vmatprep.subr.mxu0 0.0
        %1266 = vmatpush1.msra.mxu0 %v764
        %1267 = vmatprep.subr.mxu0 0.0
        %1268 = vmatpush1.msra.mxu0 %v765
        %1269 = vmatprep.subr.mxu0 0.0
        %1270 = vmatpush1.msra.mxu0 %v766
        %1271 = vmatprep.subr.mxu0 0.0
        %1272 = vmatpush1.msra.mxu0 %v767
        %1273 = vmatprep.subr.mxu0 0.0
        %1274 = vmatpush1.msra.mxu0 %v768
        %1275 = vmatprep.subr.mxu0 0.0
        %1276 = vmatpush1.msra.mxu0 %v769
        %1277 = vmatprep.subr.mxu0 0.0
        %1278 = vmatpush1.msra.mxu0 %v770
        %1279 = vmatprep.subr.mxu0 0.0
        %1280 = vmatpush1.msra.mxu0 %v771
        %1281 = vmatprep.subr.mxu0 0.0
        %1282 = vmatpush1.msra.mxu0 %v772
        %1283 = vmatprep.subr.mxu0 0.0
        %1284 = vmatpush1.msra.mxu0 %v773
        %1285 = vmatprep.subr.mxu0 0.0
        %1286 = vmatpush1.msra.mxu0 %v774
        %1287 = vmatprep.subr.mxu0 0.0
        %1288 = vmatpush1.msra.mxu0 %v775
        %1289 = vmatprep.mubr.f32.mxu0 %v203
        %1290 = vmatmul.mubr.f32.gmra.mrb[0].mxu0 %v202
        %v1291 = vpop.f32.mrb[0].mxu0
        %v1292 = vadd.f32 %v907, %v1291
        %v1293 = vpop.f32.mrb[0].mxu0
        %1294 = vmatprep.mubr.f32.mxu0 %v211
        %1295 = vmatmul.mubr.f32.gmra.mrb[0].mxu0 %v210
        %v1296 = vpop.f32.mrb[0].mxu0
        %v1297 = vadd.f32 %v912, %v1296
        %v1298 = vpop.f32.mrb[0].mxu0
        %1299 = vmatprep.mubr.f32.mxu0 %v219
        %1300 = vmatmul.mubr.f32.gmra.mrb[0].mxu0 %v218
        %v1301 = vpop.f32.mrb[0].mxu0
        %v1302 = vadd.f32 %v917, %v1301
        %v1303 = vpop.f32.mrb[0].mxu0
        %1304 = vmatprep.mubr.f32.mxu0 %v227
        %1305 = vmatmul.mubr.f32.gmra.mrb[0].mxu0 %v226
        %v1306 = vpop.f32.mrb[0].mxu0
        %v1307 = vadd.f32 %v922, %v1306
        %v1308 = vpop.f32.mrb[0].mxu0
        %1309 = vmatprep.mubr.f32.mxu0 %v235
        %1310 = vmatmul.mubr.f32.gmra.mrb[0].mxu0 %v234
        %v1311 = vpop.f32.mrb[0].mxu0
        %v1312 = vadd.f32 %v927, %v1311
        %v1313 = vpop.f32.mrb[0].mxu0
        %1314 = vmatprep.mubr.f32.mxu0 %v243
        %1315 = vmatmul.mubr.f32.gmra.mrb[0].mxu0 %v242
        %v1316 = vpop.f32.mrb[0].mxu0
        %v1317 = vadd.f32 %v932, %v1316
        %v1318 = vpop.f32.mrb[0].mxu0
        %1319 = vmatprep.mubr.f32.mxu0 %v251
        %1320 = vmatmul.mubr.f32.gmra.mrb[0].mxu0 %v250
        %v1321 = vpop.f32.mrb[0].mxu0
        %v1322 = vadd.f32 %v937, %v1321
        %v1323 = vpop.f32.mrb[0].mxu0
        %1324 = vmatprep.mubr.f32.mxu0 %v259
        %1325 = vmatmul.mubr.f32.gmra.mrb[0].mxu0 %v258
        %v1326 = vpop.f32.mrb[0].mxu0
        %v1327 = vadd.f32 %v942, %v1326
        %v1328 = vpop.f32.mrb[0].mxu0
        %1329 = vmatprep.mubr.f32.mxu0 %v267
        %1330 = vmatmul.mubr.f32.gmra.mrb[0].mxu0 %v266
        %v1331 = vpop.f32.mrb[0].mxu0
        %v1332 = vadd.f32 %v947, %v1331
        %v1333 = vpop.f32.mrb[0].mxu0
        %1334 = vmatprep.mubr.f32.mxu0 %v275
        %1335 = vmatmul.mubr.f32.gmra.mrb[0].mxu0 %v274
        %v1336 = vpop.f32.mrb[0].mxu0
        %v1337 = vadd.f32 %v952, %v1336
        %v1338 = vpop.f32.mrb[0].mxu0
        %1339 = vmatprep.mubr.f32.mxu0 %v283
        %1340 = vmatmul.mubr.f32.gmra.mrb[0].mxu0 %v282
        %v1341 = vpop.f32.mrb[0].mxu0
        %v1342 = vadd.f32 %v957, %v1341
        %v1343 = vpop.f32.mrb[0].mxu0
        %1344 = vmatprep.mubr.f32.mxu0 %v291
        %1345 = vmatmul.mubr.f32.gmra.mrb[0].mxu0 %v290
        %v1346 = vpop.f32.mrb[0].mxu0
        %v1347 = vadd.f32 %v962, %v1346
        %v1348 = vpop.f32.mrb[0].mxu0
        %1349 = vmatprep.mubr.f32.mxu0 %v299
        %1350 = vmatmul.mubr.f32.gmra.mrb[0].mxu0 %v298
        %v1351 = vpop.f32.mrb[0].mxu0
        %v1352 = vadd.f32 %v967, %v1351
        %v1353 = vpop.f32.mrb[0].mxu0
        %1354 = vmatprep.mubr.f32.mxu0 %v307
        %1355 = vmatmul.mubr.f32.gmra.mrb[0].mxu0 %v306
        %v1356 = vpop.f32.mrb[0].mxu0
        %v1357 = vadd.f32 %v972, %v1356
        %v1358 = vpop.f32.mrb[0].mxu0
        %1359 = vmatprep.mubr.f32.mxu0 %v315
        %1360 = vmatmul.mubr.f32.gmra.mrb[0].mxu0 %v314
        %v1361 = vpop.f32.mrb[0].mxu0
        %v1362 = vadd.f32 %v977, %v1361
        %v1363 = vpop.f32.mrb[0].mxu0
        %1364 = vmatprep.mubr.f32.mxu0 %v323
        %1365 = vmatmul.mubr.f32.gmra.mrb[0].mxu0 %v322
        %v1366 = vpop.f32.mrb[0].mxu0
        %v1367 = vadd.f32 %v982, %v1366
        %v1368 = vpop.f32.mrb[0].mxu0
        %1369 = vmatprep.mubr.f32.mxu0 %v331
        %1370 = vmatmul.mubr.f32.gmra.mrb[0].mxu0 %v330
        %v1371 = vpop.f32.mrb[0].mxu0
        %v1372 = vadd.f32 %v987, %v1371
        %v1373 = vpop.f32.mrb[0].mxu0
        %1374 = vmatprep.mubr.f32.mxu0 %v339
        %1375 = vmatmul.mubr.f32.gmra.mrb[0].mxu0 %v338
        %v1376 = vpop.f32.mrb[0].mxu0
        %v1377 = vadd.f32 %v992, %v1376
        %v1378 = vpop.f32.mrb[0].mxu0
        %1379 = vmatprep.mubr.f32.mxu0 %v347
        %1380 = vmatmul.mubr.f32.gmra.mrb[0].mxu0 %v346
        %v1381 = vpop.f32.mrb[0].mxu0
        %v1382 = vadd.f32 %v997, %v1381
        %v1383 = vpop.f32.mrb[0].mxu0
        %1384 = vmatprep.mubr.f32.mxu0 %v355
        %1385 = vmatmul.mubr.f32.gmra.mrb[0].mxu0 %v354
        %v1386 = vpop.f32.mrb[0].mxu0
        %v1387 = vadd.f32 %v1002, %v1386
        %v1388 = vpop.f32.mrb[0].mxu0
        %1389 = vmatprep.mubr.f32.mxu0 %v363
        %1390 = vmatmul.mubr.f32.gmra.mrb[0].mxu0 %v362
        %v1391 = vpop.f32.mrb[0].mxu0
        %v1392 = vadd.f32 %v1007, %v1391
        %v1393 = vpop.f32.mrb[0].mxu0
        %1394 = vmatprep.mubr.f32.mxu0 %v371
        %1395 = vmatmul.mubr.f32.gmra.mrb[0].mxu0 %v370
        %v1396 = vpop.f32.mrb[0].mxu0
        %v1397 = vadd.f32 %v1012, %v1396
        %v1398 = vpop.f32.mrb[0].mxu0
        %1399 = vmatprep.mubr.f32.mxu0 %v379
        %1400 = vmatmul.mubr.f32.gmra.mrb[0].mxu0 %v378
        %v1401 = vpop.f32.mrb[0].mxu0
        %v1402 = vadd.f32 %v1017, %v1401
        %v1403 = vpop.f32.mrb[0].mxu0
        %1404 = vmatprep.mubr.f32.mxu0 %v387
        %1405 = vmatmul.mubr.f32.gmra.mrb[0].mxu0 %v386
        %v1406 = vpop.f32.mrb[0].mxu0
        %v1407 = vadd.f32 %v1022, %v1406
        %v1408 = vpop.f32.mrb[0].mxu0
        %1409 = vmatprep.mubr.f32.mxu0 %v395
        %1410 = vmatmul.mubr.f32.gmra.mrb[0].mxu0 %v394
        %v1411 = vpop.f32.mrb[0].mxu0
        %v1412 = vadd.f32 %v1027, %v1411
        %v1413 = vpop.f32.mrb[0].mxu0
        %1414 = vmatprep.mubr.f32.mxu0 %v403
        %1415 = vmatmul.mubr.f32.gmra.mrb[0].mxu0 %v402
        %v1416 = vpop.f32.mrb[0].mxu0
        %v1417 = vadd.f32 %v1032, %v1416
        %v1418 = vpop.f32.mrb[0].mxu0
        %1419 = vmatprep.mubr.f32.mxu0 %v411
        %1420 = vmatmul.mubr.f32.gmra.mrb[0].mxu0 %v410
        %v1421 = vpop.f32.mrb[0].mxu0
        %v1422 = vadd.f32 %v1037, %v1421
        %v1423 = vpop.f32.mrb[0].mxu0
        %1424 = vmatprep.mubr.f32.mxu0 %v419
        %1425 = vmatmul.mubr.f32.gmra.mrb[0].mxu0 %v418
        %v1426 = vpop.f32.mrb[0].mxu0
        %v1427 = vadd.f32 %v1042, %v1426
        %v1428 = vpop.f32.mrb[0].mxu0
        %1429 = vmatprep.mubr.f32.mxu0 %v427
        %1430 = vmatmul.mubr.f32.gmra.mrb[0].mxu0 %v426
        %v1431 = vpop.f32.mrb[0].mxu0
        %v1432 = vadd.f32 %v1047, %v1431
        %v1433 = vpop.f32.mrb[0].mxu0
        %1434 = vmatprep.mubr.f32.mxu0 %v435
        %1435 = vmatmul.mubr.f32.gmra.mrb[0].mxu0 %v434
        %v1436 = vpop.f32.mrb[0].mxu0
        %v1437 = vadd.f32 %v1052, %v1436
        %v1438 = vpop.f32.mrb[0].mxu0
        %1439 = vmatprep.mubr.f32.mxu0 %v443
        %1440 = vmatmul.mubr.f32.gmra.mrb[0].mxu0 %v442
        %v1441 = vpop.f32.mrb[0].mxu0
        %v1442 = vadd.f32 %v1057, %v1441
        %v1443 = vpop.f32.mrb[0].mxu0
        %1444 = vmatprep.mubr.f32.mxu0 %v451
        %1445 = vmatmul.mubr.f32.gmra.mrb[0].mxu0 %v450
        %v1446 = vpop.f32.mrb[0].mxu0
        %v1447 = vadd.f32 %v1062, %v1446
        %v1448 = vpop.f32.mrb[0].mxu0
        %1449 = vmatprep.mubr.f32.mxu0 %v459
        %1450 = vmatmul.mubr.f32.gmra.mrb[0].mxu0 %v458
        %v1451 = vpop.f32.mrb[0].mxu0
        %v1452 = vadd.f32 %v1067, %v1451
        %v1453 = vpop.f32.mrb[0].mxu0
        %1454 = vmatprep.mubr.f32.mxu0 %v467
        %1455 = vmatmul.mubr.f32.gmra.mrb[0].mxu0 %v466
        %v1456 = vpop.f32.mrb[0].mxu0
        %v1457 = vadd.f32 %v1072, %v1456
        %v1458 = vpop.f32.mrb[0].mxu0
        %1459 = vmatprep.mubr.f32.mxu0 %v475
        %1460 = vmatmul.mubr.f32.gmra.mrb[0].mxu0 %v474
        %v1461 = vpop.f32.mrb[0].mxu0
        %v1462 = vadd.f32 %v1077, %v1461
        %v1463 = vpop.f32.mrb[0].mxu0
        %1464 = vmatprep.mubr.f32.mxu0 %v483
        %1465 = vmatmul.mubr.f32.gmra.mrb[0].mxu0 %v482
        %v1466 = vpop.f32.mrb[0].mxu0
        %v1467 = vadd.f32 %v1082, %v1466
        %v1468 = vpop.f32.mrb[0].mxu0
        %1469 = vmatprep.mubr.f32.mxu0 %v491
        %1470 = vmatmul.mubr.f32.gmra.mrb[0].mxu0 %v490
        %v1471 = vpop.f32.mrb[0].mxu0
        %v1472 = vadd.f32 %v1087, %v1471
        %v1473 = vpop.f32.mrb[0].mxu0
        %1474 = vmatprep.mubr.f32.mxu0 %v499
        %1475 = vmatmul.mubr.f32.gmra.mrb[0].mxu0 %v498
        %v1476 = vpop.f32.mrb[0].mxu0
        %v1477 = vadd.f32 %v1092, %v1476
        %v1478 = vpop.f32.mrb[0].mxu0
        %1479 = vmatprep.mubr.f32.mxu0 %v507
        %1480 = vmatmul.mubr.f32.gmra.mrb[0].mxu0 %v506
        %v1481 = vpop.f32.mrb[0].mxu0
        %v1482 = vadd.f32 %v1097, %v1481
        %v1483 = vpop.f32.mrb[0].mxu0
        %1484 = vmatprep.mubr.f32.mxu0 %v515
        %1485 = vmatmul.mubr.f32.gmra.mrb[0].mxu0 %v514
        %v1486 = vpop.f32.mrb[0].mxu0
        %v1487 = vadd.f32 %v1102, %v1486
        %v1488 = vpop.f32.mrb[0].mxu0
        %1489 = vmatprep.mubr.f32.mxu0 %v523
        %1490 = vmatmul.mubr.f32.gmra.mrb[0].mxu0 %v522
        %v1491 = vpop.f32.mrb[0].mxu0
        %v1492 = vadd.f32 %v1107, %v1491
        %v1493 = vpop.f32.mrb[0].mxu0
        %1494 = vmatprep.mubr.f32.mxu0 %v531
        %1495 = vmatmul.mubr.f32.gmra.mrb[0].mxu0 %v530
        %v1496 = vpop.f32.mrb[0].mxu0
        %v1497 = vadd.f32 %v1112, %v1496
        %v1498 = vpop.f32.mrb[0].mxu0
        %1499 = vmatprep.mubr.f32.mxu0 %v539
        %1500 = vmatmul.mubr.f32.gmra.mrb[0].mxu0 %v538
        %v1501 = vpop.f32.mrb[0].mxu0
        %v1502 = vadd.f32 %v1117, %v1501
        %v1503 = vpop.f32.mrb[0].mxu0
        %1504 = vmatprep.mubr.f32.mxu0 %v547
        %1505 = vmatmul.mubr.f32.gmra.mrb[0].mxu0 %v546
        %v1506 = vpop.f32.mrb[0].mxu0
        %v1507 = vadd.f32 %v1122, %v1506
        %v1508 = vpop.f32.mrb[0].mxu0
        %1509 = vmatprep.mubr.f32.mxu0 %v555
        %1510 = vmatmul.mubr.f32.gmra.mrb[0].mxu0 %v554
        %v1511 = vpop.f32.mrb[0].mxu0
        %v1512 = vadd.f32 %v1127, %v1511
        %v1513 = vpop.f32.mrb[0].mxu0
        %1514 = vmatprep.mubr.f32.mxu0 %v563
        %1515 = vmatmul.mubr.f32.gmra.mrb[0].mxu0 %v562
        %v1516 = vpop.f32.mrb[0].mxu0
        %v1517 = vadd.f32 %v1132, %v1516
        %v1518 = vpop.f32.mrb[0].mxu0
        %1519 = vmatprep.mubr.f32.mxu0 %v571
        %1520 = vmatmul.mubr.f32.gmra.mrb[0].mxu0 %v570
        %v1521 = vpop.f32.mrb[0].mxu0
        %v1522 = vadd.f32 %v1137, %v1521
        %v1523 = vpop.f32.mrb[0].mxu0
        %1524 = vmatprep.mubr.f32.mxu0 %v579
        %1525 = vmatmul.mubr.f32.gmra.mrb[0].mxu0 %v578
        %v1526 = vpop.f32.mrb[0].mxu0
        %v1527 = vadd.f32 %v1142, %v1526
        %v1528 = vpop.f32.mrb[0].mxu0
        %1529 = vmatprep.mubr.f32.mxu0 %v587
        %1530 = vmatmul.mubr.f32.gmra.mrb[0].mxu0 %v586
        %v1531 = vpop.f32.mrb[0].mxu0
        %v1532 = vadd.f32 %v1147, %v1531
        %v1533 = vpop.f32.mrb[0].mxu0
        %1534 = vmatprep.mubr.f32.mxu0 %v595
        %1535 = vmatmul.mubr.f32.gmra.mrb[0].mxu0 %v594
        %v1536 = vpop.f32.mrb[0].mxu0
        %v1537 = vadd.f32 %v1152, %v1536
        %v1538 = vpop.f32.mrb[0].mxu0
        %1539 = vmatprep.mubr.f32.mxu0 %v603
        %1540 = vmatmul.mubr.f32.gmra.mrb[0].mxu0 %v602
        %v1541 = vpop.f32.mrb[0].mxu0
        %v1542 = vadd.f32 %v1157, %v1541
        %v1543 = vpop.f32.mrb[0].mxu0
        %1544 = vmatprep.mubr.f32.mxu0 %v611
        %1545 = vmatmul.mubr.f32.gmra.mrb[0].mxu0 %v610
        %v1546 = vpop.f32.mrb[0].mxu0
        %v1547 = vadd.f32 %v1162, %v1546
        %v1548 = vpop.f32.mrb[0].mxu0
        %1549 = vmatprep.mubr.f32.mxu0 %v619
        %1550 = vmatmul.mubr.f32.gmra.mrb[0].mxu0 %v618
        %v1551 = vpop.f32.mrb[0].mxu0
        %v1552 = vadd.f32 %v1167, %v1551
        %v1553 = vpop.f32.mrb[0].mxu0
        %1554 = vmatprep.mubr.f32.mxu0 %v627
        %1555 = vmatmul.mubr.f32.gmra.mrb[0].mxu0 %v626
        %v1556 = vpop.f32.mrb[0].mxu0
        %v1557 = vadd.f32 %v1172, %v1556
        %v1558 = vpop.f32.mrb[0].mxu0
        %1559 = vmatprep.mubr.f32.mxu0 %v635
        %1560 = vmatmul.mubr.f32.gmra.mrb[0].mxu0 %v634
        %v1561 = vpop.f32.mrb[0].mxu0
        %v1562 = vadd.f32 %v1177, %v1561
        %v1563 = vpop.f32.mrb[0].mxu0
        %1564 = vmatprep.mubr.f32.mxu0 %v643
        %1565 = vmatmul.mubr.f32.gmra.mrb[0].mxu0 %v642
        %v1566 = vpop.f32.mrb[0].mxu0
        %v1567 = vadd.f32 %v1182, %v1566
        %v1568 = vpop.f32.mrb[0].mxu0
        %1569 = vmatprep.mubr.f32.mxu0 %v651
        %1570 = vmatmul.mubr.f32.gmra.mrb[0].mxu0 %v650
        %v1571 = vpop.f32.mrb[0].mxu0
        %v1572 = vadd.f32 %v1187, %v1571
        %v1573 = vpop.f32.mrb[0].mxu0
        %1574 = vmatprep.mubr.f32.mxu0 %v659
        %1575 = vmatmul.mubr.f32.gmra.mrb[0].mxu0 %v658
        %v1576 = vpop.f32.mrb[0].mxu0
        %v1577 = vadd.f32 %v1192, %v1576
        %v1578 = vpop.f32.mrb[0].mxu0
        %1579 = vmatprep.mubr.f32.mxu0 %v667
        %1580 = vmatmul.mubr.f32.gmra.mrb[0].mxu0 %v666
        %v1581 = vpop.f32.mrb[0].mxu0
        %v1582 = vadd.f32 %v1197, %v1581
        %v1583 = vpop.f32.mrb[0].mxu0
        %1584 = vmatprep.mubr.f32.mxu0 %v675
        %1585 = vmatmul.mubr.f32.gmra.mrb[0].mxu0 %v674
        %v1586 = vpop.f32.mrb[0].mxu0
        %v1587 = vadd.f32 %v1202, %v1586
        %v1588 = vpop.f32.mrb[0].mxu0
        %1589 = vmatprep.mubr.f32.mxu0 %v683
        %1590 = vmatmul.mubr.f32.gmra.mrb[0].mxu0 %v682
        %v1591 = vpop.f32.mrb[0].mxu0
        %v1592 = vadd.f32 %v1207, %v1591
        %v1593 = vpop.f32.mrb[0].mxu0
        %1594 = vmatprep.mubr.f32.mxu0 %v691
        %1595 = vmatmul.mubr.f32.gmra.mrb[0].mxu0 %v690
        %v1596 = vpop.f32.mrb[0].mxu0
        %v1597 = vadd.f32 %v1212, %v1596
        %v1598 = vpop.f32.mrb[0].mxu0
        %1599 = vmatprep.mubr.f32.mxu0 %v699
        %1600 = vmatmul.mubr.f32.gmra.mrb[0].mxu0 %v698
        %v1601 = vpop.f32.mrb[0].mxu0
        %v1602 = vadd.f32 %v1217, %v1601
        %v1603 = vpop.f32.mrb[0].mxu0
        %1604 = vmatprep.mubr.f32.mxu0 %v707
        %1605 = vmatmul.mubr.f32.gmra.mrb[0].mxu0 %v706
        %v1606 = vpop.f32.mrb[0].mxu0
        %v1607 = vadd.f32 %v1222, %v1606
        %v1608 = vpop.f32.mrb[0].mxu0
        %1609 = vdwg.mxu0
        %1610 = vmatprep.subr.mxu0 0.0
        %1611 = vmatpush1.msra.mxu0 %v776
        %1612 = vmatprep.subr.mxu0 0.0
        %1613 = vmatpush1.msra.mxu0 %v777
        %1614 = vmatprep.subr.mxu0 0.0
        %1615 = vmatpush1.msra.mxu0 %v778
        %1616 = vmatprep.subr.mxu0 0.0
        %1617 = vmatpush1.msra.mxu0 %v779
        %1618 = vmatprep.subr.mxu0 0.0
        %1619 = vmatpush1.msra.mxu0 %v780
        %1620 = vmatprep.subr.mxu0 0.0
        %1621 = vmatpush1.msra.mxu0 %v781
        %1622 = vmatprep.subr.mxu0 0.0
        %1623 = vmatpush1.msra.mxu0 %v782
        %1624 = vmatprep.subr.mxu0 0.0
        %1625 = vmatpush1.msra.mxu0 %v783
        %1626 = vmatprep.subr.mxu0 0.0
        %1627 = vmatpush1.msra.mxu0 %v784
        %1628 = vmatprep.subr.mxu0 0.0
        %1629 = vmatpush1.msra.mxu0 %v785
        %1630 = vmatprep.subr.mxu0 0.0
        %1631 = vmatpush1.msra.mxu0 %v786
        %1632 = vmatprep.subr.mxu0 0.0
        %1633 = vmatpush1.msra.mxu0 %v787
        %1634 = vmatprep.subr.mxu0 0.0
        %1635 = vmatpush1.msra.mxu0 %v788
        %1636 = vmatprep.subr.mxu0 0.0
        %1637 = vmatpush1.msra.mxu0 %v789
        %1638 = vmatprep.subr.mxu0 0.0
        %1639 = vmatpush1.msra.mxu0 %v790
        %1640 = vmatprep.subr.mxu0 0.0
        %1641 = vmatpush1.msra.mxu0 %v791
        %1642 = vmatprep.subr.mxu0 0.0
        %1643 = vmatpush1.msra.mxu0 %v792
        %1644 = vmatprep.subr.mxu0 0.0
        %1645 = vmatpush1.msra.mxu0 %v793
        %1646 = vmatprep.subr.mxu0 0.0
        %1647 = vmatpush1.msra.mxu0 %v794
        %1648 = vmatprep.subr.mxu0 0.0
        %1649 = vmatpush1.msra.mxu0 %v795
        %1650 = vmatprep.subr.mxu0 0.0
        %1651 = vmatpush1.msra.mxu0 %v796
        %1652 = vmatprep.subr.mxu0 0.0
        %1653 = vmatpush1.msra.mxu0 %v797
        %1654 = vmatprep.subr.mxu0 0.0
        %1655 = vmatpush1.msra.mxu0 %v798
        %1656 = vmatprep.subr.mxu0 0.0
        %1657 = vmatpush1.msra.mxu0 %v799
        %1658 = vmatprep.subr.mxu0 0.0
        %1659 = vmatpush1.msra.mxu0 %v800
        %1660 = vmatprep.subr.mxu0 0.0
        %1661 = vmatpush1.msra.mxu0 %v801
        %1662 = vmatprep.subr.mxu0 0.0
        %1663 = vmatpush1.msra.mxu0 %v802
        %1664 = vmatprep.subr.mxu0 0.0
        %1665 = vmatpush1.msra.mxu0 %v803
        %1666 = vmatprep.subr.mxu0 0.0
        %1667 = vmatpush1.msra.mxu0 %v804
        %1668 = vmatprep.subr.mxu0 0.0
        %1669 = vmatpush1.msra.mxu0 %v805
        %1670 = vmatprep.subr.mxu0 0.0
        %1671 = vmatpush1.msra.mxu0 %v806
        %1672 = vmatprep.subr.mxu0 0.0
        %1673 = vmatpush1.msra.mxu0 %v807
        %1674 = vmatprep.mubr.f32.mxu0 %v205
        %1675 = vmatmul.mubr.f32.gmra.mrb[0].mxu0 %v204
        %v1676 = vpop.f32.mrb[0].mxu0
        %v1677 = vadd.f32 %v1292, %v1676
        %v1678 = vpop.f32.mrb[0].mxu0
        %1679 = vmatprep.mubr.f32.mxu0 %v213
        %1680 = vmatmul.mubr.f32.gmra.mrb[0].mxu0 %v212
        %v1681 = vpop.f32.mrb[0].mxu0
        %v1682 = vadd.f32 %v1297, %v1681
        %v1683 = vpop.f32.mrb[0].mxu0
        %1684 = vmatprep.mubr.f32.mxu0 %v221
        %1685 = vmatmul.mubr.f32.gmra.mrb[0].mxu0 %v220
        %v1686 = vpop.f32.mrb[0].mxu0
        %v1687 = vadd.f32 %v1302, %v1686
        %v1688 = vpop.f32.mrb[0].mxu0
        %1689 = vmatprep.mubr.f32.mxu0 %v229
        %1690 = vmatmul.mubr.f32.gmra.mrb[0].mxu0 %v228
        %v1691 = vpop.f32.mrb[0].mxu0
        %v1692 = vadd.f32 %v1307, %v1691
        %v1693 = vpop.f32.mrb[0].mxu0
        %1694 = vmatprep.mubr.f32.mxu0 %v237
        %1695 = vmatmul.mubr.f32.gmra.mrb[0].mxu0 %v236
        %v1696 = vpop.f32.mrb[0].mxu0
        %v1697 = vadd.f32 %v1312, %v1696
        %v1698 = vpop.f32.mrb[0].mxu0
        %1699 = vmatprep.mubr.f32.mxu0 %v245
        %1700 = vmatmul.mubr.f32.gmra.mrb[0].mxu0 %v244
        %v1701 = vpop.f32.mrb[0].mxu0
        %v1702 = vadd.f32 %v1317, %v1701
        %v1703 = vpop.f32.mrb[0].mxu0
        %1704 = vmatprep.mubr.f32.mxu0 %v253
        %1705 = vmatmul.mubr.f32.gmra.mrb[0].mxu0 %v252
        %v1706 = vpop.f32.mrb[0].mxu0
        %v1707 = vadd.f32 %v1322, %v1706
        %v1708 = vpop.f32.mrb[0].mxu0
        %1709 = vmatprep.mubr.f32.mxu0 %v261
        %1710 = vmatmul.mubr.f32.gmra.mrb[0].mxu0 %v260
        %v1711 = vpop.f32.mrb[0].mxu0
        %v1712 = vadd.f32 %v1327, %v1711
        %v1713 = vpop.f32.mrb[0].mxu0
        %1714 = vmatprep.mubr.f32.mxu0 %v269
        %1715 = vmatmul.mubr.f32.gmra.mrb[0].mxu0 %v268
        %v1716 = vpop.f32.mrb[0].mxu0
        %v1717 = vadd.f32 %v1332, %v1716
        %v1718 = vpop.f32.mrb[0].mxu0
        %1719 = vmatprep.mubr.f32.mxu0 %v277
        %1720 = vmatmul.mubr.f32.gmra.mrb[0].mxu0 %v276
        %v1721 = vpop.f32.mrb[0].mxu0
        %v1722 = vadd.f32 %v1337, %v1721
        %v1723 = vpop.f32.mrb[0].mxu0
        %1724 = vmatprep.mubr.f32.mxu0 %v285
        %1725 = vmatmul.mubr.f32.gmra.mrb[0].mxu0 %v284
        %v1726 = vpop.f32.mrb[0].mxu0
        %v1727 = vadd.f32 %v1342, %v1726
        %v1728 = vpop.f32.mrb[0].mxu0
        %1729 = vmatprep.mubr.f32.mxu0 %v293
        %1730 = vmatmul.mubr.f32.gmra.mrb[0].mxu0 %v292
        %v1731 = vpop.f32.mrb[0].mxu0
        %v1732 = vadd.f32 %v1347, %v1731
        %v1733 = vpop.f32.mrb[0].mxu0
        %1734 = vmatprep.mubr.f32.mxu0 %v301
        %1735 = vmatmul.mubr.f32.gmra.mrb[0].mxu0 %v300
        %v1736 = vpop.f32.mrb[0].mxu0
        %v1737 = vadd.f32 %v1352, %v1736
        %v1738 = vpop.f32.mrb[0].mxu0
        %1739 = vmatprep.mubr.f32.mxu0 %v309
        %1740 = vmatmul.mubr.f32.gmra.mrb[0].mxu0 %v308
        %v1741 = vpop.f32.mrb[0].mxu0
        %v1742 = vadd.f32 %v1357, %v1741
        %v1743 = vpop.f32.mrb[0].mxu0
        %1744 = vmatprep.mubr.f32.mxu0 %v317
        %1745 = vmatmul.mubr.f32.gmra.mrb[0].mxu0 %v316
        %v1746 = vpop.f32.mrb[0].mxu0
        %v1747 = vadd.f32 %v1362, %v1746
        %v1748 = vpop.f32.mrb[0].mxu0
        %1749 = vmatprep.mubr.f32.mxu0 %v325
        %1750 = vmatmul.mubr.f32.gmra.mrb[0].mxu0 %v324
        %v1751 = vpop.f32.mrb[0].mxu0
        %v1752 = vadd.f32 %v1367, %v1751
        %v1753 = vpop.f32.mrb[0].mxu0
        %1754 = vmatprep.mubr.f32.mxu0 %v333
        %1755 = vmatmul.mubr.f32.gmra.mrb[0].mxu0 %v332
        %v1756 = vpop.f32.mrb[0].mxu0
        %v1757 = vadd.f32 %v1372, %v1756
        %v1758 = vpop.f32.mrb[0].mxu0
        %1759 = vmatprep.mubr.f32.mxu0 %v341
        %1760 = vmatmul.mubr.f32.gmra.mrb[0].mxu0 %v340
        %v1761 = vpop.f32.mrb[0].mxu0
        %v1762 = vadd.f32 %v1377, %v1761
        %v1763 = vpop.f32.mrb[0].mxu0
        %1764 = vmatprep.mubr.f32.mxu0 %v349
        %1765 = vmatmul.mubr.f32.gmra.mrb[0].mxu0 %v348
        %v1766 = vpop.f32.mrb[0].mxu0
        %v1767 = vadd.f32 %v1382, %v1766
        %v1768 = vpop.f32.mrb[0].mxu0
        %1769 = vmatprep.mubr.f32.mxu0 %v357
        %1770 = vmatmul.mubr.f32.gmra.mrb[0].mxu0 %v356
        %v1771 = vpop.f32.mrb[0].mxu0
        %v1772 = vadd.f32 %v1387, %v1771
        %v1773 = vpop.f32.mrb[0].mxu0
        %1774 = vmatprep.mubr.f32.mxu0 %v365
        %1775 = vmatmul.mubr.f32.gmra.mrb[0].mxu0 %v364
        %v1776 = vpop.f32.mrb[0].mxu0
        %v1777 = vadd.f32 %v1392, %v1776
        %v1778 = vpop.f32.mrb[0].mxu0
        %1779 = vmatprep.mubr.f32.mxu0 %v373
        %1780 = vmatmul.mubr.f32.gmra.mrb[0].mxu0 %v372
        %v1781 = vpop.f32.mrb[0].mxu0
        %v1782 = vadd.f32 %v1397, %v1781
        %v1783 = vpop.f32.mrb[0].mxu0
        %1784 = vmatprep.mubr.f32.mxu0 %v381
        %1785 = vmatmul.mubr.f32.gmra.mrb[0].mxu0 %v380
        %v1786 = vpop.f32.mrb[0].mxu0
        %v1787 = vadd.f32 %v1402, %v1786
        %v1788 = vpop.f32.mrb[0].mxu0
        %1789 = vmatprep.mubr.f32.mxu0 %v389
        %1790 = vmatmul.mubr.f32.gmra.mrb[0].mxu0 %v388
        %v1791 = vpop.f32.mrb[0].mxu0
        %v1792 = vadd.f32 %v1407, %v1791
        %v1793 = vpop.f32.mrb[0].mxu0
        %1794 = vmatprep.mubr.f32.mxu0 %v397
        %1795 = vmatmul.mubr.f32.gmra.mrb[0].mxu0 %v396
        %v1796 = vpop.f32.mrb[0].mxu0
        %v1797 = vadd.f32 %v1412, %v1796
        %v1798 = vpop.f32.mrb[0].mxu0
        %1799 = vmatprep.mubr.f32.mxu0 %v405
        %1800 = vmatmul.mubr.f32.gmra.mrb[0].mxu0 %v404
        %v1801 = vpop.f32.mrb[0].mxu0
        %v1802 = vadd.f32 %v1417, %v1801
        %v1803 = vpop.f32.mrb[0].mxu0
        %1804 = vmatprep.mubr.f32.mxu0 %v413
        %1805 = vmatmul.mubr.f32.gmra.mrb[0].mxu0 %v412
        %v1806 = vpop.f32.mrb[0].mxu0
        %v1807 = vadd.f32 %v1422, %v1806
        %v1808 = vpop.f32.mrb[0].mxu0
        %1809 = vmatprep.mubr.f32.mxu0 %v421
        %1810 = vmatmul.mubr.f32.gmra.mrb[0].mxu0 %v420
        %v1811 = vpop.f32.mrb[0].mxu0
        %v1812 = vadd.f32 %v1427, %v1811
        %v1813 = vpop.f32.mrb[0].mxu0
        %1814 = vmatprep.mubr.f32.mxu0 %v429
        %1815 = vmatmul.mubr.f32.gmra.mrb[0].mxu0 %v428
        %v1816 = vpop.f32.mrb[0].mxu0
        %v1817 = vadd.f32 %v1432, %v1816
        %v1818 = vpop.f32.mrb[0].mxu0
        %1819 = vmatprep.mubr.f32.mxu0 %v437
        %1820 = vmatmul.mubr.f32.gmra.mrb[0].mxu0 %v436
        %v1821 = vpop.f32.mrb[0].mxu0
        %v1822 = vadd.f32 %v1437, %v1821
        %v1823 = vpop.f32.mrb[0].mxu0
        %1824 = vmatprep.mubr.f32.mxu0 %v445
        %1825 = vmatmul.mubr.f32.gmra.mrb[0].mxu0 %v444
        %v1826 = vpop.f32.mrb[0].mxu0
        %v1827 = vadd.f32 %v1442, %v1826
        %v1828 = vpop.f32.mrb[0].mxu0
        %1829 = vmatprep.mubr.f32.mxu0 %v453
        %1830 = vmatmul.mubr.f32.gmra.mrb[0].mxu0 %v452
        %v1831 = vpop.f32.mrb[0].mxu0
        %v1832 = vadd.f32 %v1447, %v1831
        %v1833 = vpop.f32.mrb[0].mxu0
        %1834 = vmatprep.mubr.f32.mxu0 %v461
        %1835 = vmatmul.mubr.f32.gmra.mrb[0].mxu0 %v460
        %v1836 = vpop.f32.mrb[0].mxu0
        %v1837 = vadd.f32 %v1452, %v1836
        %v1838 = vpop.f32.mrb[0].mxu0
        %1839 = vmatprep.mubr.f32.mxu0 %v469
        %1840 = vmatmul.mubr.f32.gmra.mrb[0].mxu0 %v468
        %v1841 = vpop.f32.mrb[0].mxu0
        %v1842 = vadd.f32 %v1457, %v1841
        %v1843 = vpop.f32.mrb[0].mxu0
        %1844 = vmatprep.mubr.f32.mxu0 %v477
        %1845 = vmatmul.mubr.f32.gmra.mrb[0].mxu0 %v476
        %v1846 = vpop.f32.mrb[0].mxu0
        %v1847 = vadd.f32 %v1462, %v1846
        %v1848 = vpop.f32.mrb[0].mxu0
        %1849 = vmatprep.mubr.f32.mxu0 %v485
        %1850 = vmatmul.mubr.f32.gmra.mrb[0].mxu0 %v484
        %v1851 = vpop.f32.mrb[0].mxu0
        %v1852 = vadd.f32 %v1467, %v1851
        %v1853 = vpop.f32.mrb[0].mxu0
        %1854 = vmatprep.mubr.f32.mxu0 %v493
        %1855 = vmatmul.mubr.f32.gmra.mrb[0].mxu0 %v492
        %v1856 = vpop.f32.mrb[0].mxu0
        %v1857 = vadd.f32 %v1472, %v1856
        %v1858 = vpop.f32.mrb[0].mxu0
        %1859 = vmatprep.mubr.f32.mxu0 %v501
        %1860 = vmatmul.mubr.f32.gmra.mrb[0].mxu0 %v500
        %v1861 = vpop.f32.mrb[0].mxu0
        %v1862 = vadd.f32 %v1477, %v1861
        %v1863 = vpop.f32.mrb[0].mxu0
        %1864 = vmatprep.mubr.f32.mxu0 %v509
        %1865 = vmatmul.mubr.f32.gmra.mrb[0].mxu0 %v508
        %v1866 = vpop.f32.mrb[0].mxu0
        %v1867 = vadd.f32 %v1482, %v1866
        %v1868 = vpop.f32.mrb[0].mxu0
        %1869 = vmatprep.mubr.f32.mxu0 %v517
        %1870 = vmatmul.mubr.f32.gmra.mrb[0].mxu0 %v516
        %v1871 = vpop.f32.mrb[0].mxu0
        %v1872 = vadd.f32 %v1487, %v1871
        %v1873 = vpop.f32.mrb[0].mxu0
        %1874 = vmatprep.mubr.f32.mxu0 %v525
        %1875 = vmatmul.mubr.f32.gmra.mrb[0].mxu0 %v524
        %v1876 = vpop.f32.mrb[0].mxu0
        %v1877 = vadd.f32 %v1492, %v1876
        %v1878 = vpop.f32.mrb[0].mxu0
        %1879 = vmatprep.mubr.f32.mxu0 %v533
        %1880 = vmatmul.mubr.f32.gmra.mrb[0].mxu0 %v532
        %v1881 = vpop.f32.mrb[0].mxu0
        %v1882 = vadd.f32 %v1497, %v1881
        %v1883 = vpop.f32.mrb[0].mxu0
        %1884 = vmatprep.mubr.f32.mxu0 %v541
        %1885 = vmatmul.mubr.f32.gmra.mrb[0].mxu0 %v540
        %v1886 = vpop.f32.mrb[0].mxu0
        %v1887 = vadd.f32 %v1502, %v1886
        %v1888 = vpop.f32.mrb[0].mxu0
        %1889 = vmatprep.mubr.f32.mxu0 %v549
        %1890 = vmatmul.mubr.f32.gmra.mrb[0].mxu0 %v548
        %v1891 = vpop.f32.mrb[0].mxu0
        %v1892 = vadd.f32 %v1507, %v1891
        %v1893 = vpop.f32.mrb[0].mxu0
        %1894 = vmatprep.mubr.f32.mxu0 %v557
        %1895 = vmatmul.mubr.f32.gmra.mrb[0].mxu0 %v556
        %v1896 = vpop.f32.mrb[0].mxu0
        %v1897 = vadd.f32 %v1512, %v1896
        %v1898 = vpop.f32.mrb[0].mxu0
        %1899 = vmatprep.mubr.f32.mxu0 %v565
        %1900 = vmatmul.mubr.f32.gmra.mrb[0].mxu0 %v564
        %v1901 = vpop.f32.mrb[0].mxu0
        %v1902 = vadd.f32 %v1517, %v1901
        %v1903 = vpop.f32.mrb[0].mxu0
        %1904 = vmatprep.mubr.f32.mxu0 %v573
        %1905 = vmatmul.mubr.f32.gmra.mrb[0].mxu0 %v572
        %v1906 = vpop.f32.mrb[0].mxu0
        %v1907 = vadd.f32 %v1522, %v1906
        %v1908 = vpop.f32.mrb[0].mxu0
        %1909 = vmatprep.mubr.f32.mxu0 %v581
        %1910 = vmatmul.mubr.f32.gmra.mrb[0].mxu0 %v580
        %v1911 = vpop.f32.mrb[0].mxu0
        %v1912 = vadd.f32 %v1527, %v1911
        %v1913 = vpop.f32.mrb[0].mxu0
        %1914 = vmatprep.mubr.f32.mxu0 %v589
        %1915 = vmatmul.mubr.f32.gmra.mrb[0].mxu0 %v588
        %v1916 = vpop.f32.mrb[0].mxu0
        %v1917 = vadd.f32 %v1532, %v1916
        %v1918 = vpop.f32.mrb[0].mxu0
        %1919 = vmatprep.mubr.f32.mxu0 %v597
        %1920 = vmatmul.mubr.f32.gmra.mrb[0].mxu0 %v596
        %v1921 = vpop.f32.mrb[0].mxu0
        %v1922 = vadd.f32 %v1537, %v1921
        %v1923 = vpop.f32.mrb[0].mxu0
        %1924 = vmatprep.mubr.f32.mxu0 %v605
        %1925 = vmatmul.mubr.f32.gmra.mrb[0].mxu0 %v604
        %v1926 = vpop.f32.mrb[0].mxu0
        %v1927 = vadd.f32 %v1542, %v1926
        %v1928 = vpop.f32.mrb[0].mxu0
        %1929 = vmatprep.mubr.f32.mxu0 %v613
        %1930 = vmatmul.mubr.f32.gmra.mrb[0].mxu0 %v612
        %v1931 = vpop.f32.mrb[0].mxu0
        %v1932 = vadd.f32 %v1547, %v1931
        %v1933 = vpop.f32.mrb[0].mxu0
        %1934 = vmatprep.mubr.f32.mxu0 %v621
        %1935 = vmatmul.mubr.f32.gmra.mrb[0].mxu0 %v620
        %v1936 = vpop.f32.mrb[0].mxu0
        %v1937 = vadd.f32 %v1552, %v1936
        %v1938 = vpop.f32.mrb[0].mxu0
        %1939 = vmatprep.mubr.f32.mxu0 %v629
        %1940 = vmatmul.mubr.f32.gmra.mrb[0].mxu0 %v628
        %v1941 = vpop.f32.mrb[0].mxu0
        %v1942 = vadd.f32 %v1557, %v1941
        %v1943 = vpop.f32.mrb[0].mxu0
        %1944 = vmatprep.mubr.f32.mxu0 %v637
        %1945 = vmatmul.mubr.f32.gmra.mrb[0].mxu0 %v636
        %v1946 = vpop.f32.mrb[0].mxu0
        %v1947 = vadd.f32 %v1562, %v1946
        %v1948 = vpop.f32.mrb[0].mxu0
        %1949 = vmatprep.mubr.f32.mxu0 %v645
        %1950 = vmatmul.mubr.f32.gmra.mrb[0].mxu0 %v644
        %v1951 = vpop.f32.mrb[0].mxu0
        %v1952 = vadd.f32 %v1567, %v1951
        %v1953 = vpop.f32.mrb[0].mxu0
        %1954 = vmatprep.mubr.f32.mxu0 %v653
        %1955 = vmatmul.mubr.f32.gmra.mrb[0].mxu0 %v652
        %v1956 = vpop.f32.mrb[0].mxu0
        %v1957 = vadd.f32 %v1572, %v1956
        %v1958 = vpop.f32.mrb[0].mxu0
        %1959 = vmatprep.mubr.f32.mxu0 %v661
        %1960 = vmatmul.mubr.f32.gmra.mrb[0].mxu0 %v660
        %v1961 = vpop.f32.mrb[0].mxu0
        %v1962 = vadd.f32 %v1577, %v1961
        %v1963 = vpop.f32.mrb[0].mxu0
        %1964 = vmatprep.mubr.f32.mxu0 %v669
        %1965 = vmatmul.mubr.f32.gmra.mrb[0].mxu0 %v668
        %v1966 = vpop.f32.mrb[0].mxu0
        %v1967 = vadd.f32 %v1582, %v1966
        %v1968 = vpop.f32.mrb[0].mxu0
        %1969 = vmatprep.mubr.f32.mxu0 %v677
        %1970 = vmatmul.mubr.f32.gmra.mrb[0].mxu0 %v676
        %v1971 = vpop.f32.mrb[0].mxu0
        %v1972 = vadd.f32 %v1587, %v1971
        %v1973 = vpop.f32.mrb[0].mxu0
        %1974 = vmatprep.mubr.f32.mxu0 %v685
        %1975 = vmatmul.mubr.f32.gmra.mrb[0].mxu0 %v684
        %v1976 = vpop.f32.mrb[0].mxu0
        %v1977 = vadd.f32 %v1592, %v1976
        %v1978 = vpop.f32.mrb[0].mxu0
        %1979 = vmatprep.mubr.f32.mxu0 %v693
        %1980 = vmatmul.mubr.f32.gmra.mrb[0].mxu0 %v692
        %v1981 = vpop.f32.mrb[0].mxu0
        %v1982 = vadd.f32 %v1597, %v1981
        %v1983 = vpop.f32.mrb[0].mxu0
        %1984 = vmatprep.mubr.f32.mxu0 %v701
        %1985 = vmatmul.mubr.f32.gmra.mrb[0].mxu0 %v700
        %v1986 = vpop.f32.mrb[0].mxu0
        %v1987 = vadd.f32 %v1602, %v1986
        %v1988 = vpop.f32.mrb[0].mxu0
        %1989 = vmatprep.mubr.f32.mxu0 %v709
        %1990 = vmatmul.mubr.f32.gmra.mrb[0].mxu0 %v708
        %v1991 = vpop.f32.mrb[0].mxu0
        %v1992 = vadd.f32 %v1607, %v1991
        %v1993 = vpop.f32.mrb[0].mxu0
        %1994 = vdwg.mxu0
        %1995 = vmatprep.subr.mxu0 0.0
        %1996 = vmatpush1.msra.mxu0 %v808
        %1997 = vmatprep.subr.mxu0 0.0
        %1998 = vmatpush1.msra.mxu0 %v809
        %1999 = vmatprep.subr.mxu0 0.0
        %2000 = vmatpush1.msra.mxu0 %v810
        %2001 = vmatprep.subr.mxu0 0.0
        %2002 = vmatpush1.msra.mxu0 %v811
        %2003 = vmatprep.subr.mxu0 0.0
        %2004 = vmatpush1.msra.mxu0 %v812
        %2005 = vmatprep.subr.mxu0 0.0
        %2006 = vmatpush1.msra.mxu0 %v813
        %2007 = vmatprep.subr.mxu0 0.0
        %2008 = vmatpush1.msra.mxu0 %v814
        %2009 = vmatprep.subr.mxu0 0.0
        %2010 = vmatpush1.msra.mxu0 %v815
        %2011 = vmatprep.subr.mxu0 0.0
        %2012 = vmatpush1.msra.mxu0 %v816
        %2013 = vmatprep.subr.mxu0 0.0
        %2014 = vmatpush1.msra.mxu0 %v817
        %2015 = vmatprep.subr.mxu0 0.0
        %2016 = vmatpush1.msra.mxu0 %v818
        %2017 = vmatprep.subr.mxu0 0.0
        %2018 = vmatpush1.msra.mxu0 %v819
        %2019 = vmatprep.subr.mxu0 0.0
        %2020 = vmatpush1.msra.mxu0 %v820
        %2021 = vmatprep.subr.mxu0 0.0
        %2022 = vmatpush1.msra.mxu0 %v821
        %2023 = vmatprep.subr.mxu0 0.0
        %2024 = vmatpush1.msra.mxu0 %v822
        %2025 = vmatprep.subr.mxu0 0.0
        %2026 = vmatpush1.msra.mxu0 %v823
        %2027 = vmatprep.subr.mxu0 0.0
        %2028 = vmatpush1.msra.mxu0 %v824
        %2029 = vmatprep.subr.mxu0 0.0
        %2030 = vmatpush1.msra.mxu0 %v825
        %2031 = vmatprep.subr.mxu0 0.0
        %2032 = vmatpush1.msra.mxu0 %v826
        %2033 = vmatprep.subr.mxu0 0.0
        %2034 = vmatpush1.msra.mxu0 %v827
        %2035 = vmatprep.subr.mxu0 0.0
        %2036 = vmatpush1.msra.mxu0 %v828
        %2037 = vmatprep.subr.mxu0 0.0
        %2038 = vmatpush1.msra.mxu0 %v829
        %2039 = vmatprep.subr.mxu0 0.0
        %2040 = vmatpush1.msra.mxu0 %v830
        %2041 = vmatprep.subr.mxu0 0.0
        %2042 = vmatpush1.msra.mxu0 %v831
        %2043 = vmatprep.subr.mxu0 0.0
        %2044 = vmatpush1.msra.mxu0 %v832
        %2045 = vmatprep.subr.mxu0 0.0
        %2046 = vmatpush1.msra.mxu0 %v833
        %2047 = vmatprep.subr.mxu0 0.0
        %2048 = vmatpush1.msra.mxu0 %v834
        %2049 = vmatprep.subr.mxu0 0.0
        %2050 = vmatpush1.msra.mxu0 %v835
        %2051 = vmatprep.subr.mxu0 0.0
        %2052 = vmatpush1.msra.mxu0 %v836
        %2053 = vmatprep.subr.mxu0 0.0
        %2054 = vmatpush1.msra.mxu0 %v837
        %2055 = vmatprep.subr.mxu0 0.0
        %2056 = vmatpush1.msra.mxu0 %v838
        %2057 = vmatprep.subr.mxu0 0.0
        %2058 = vmatpush1.msra.mxu0 %v839
        %2059 = vmatprep.mubr.f32.mxu0 %v207
        %2060 = vmatmul.mubr.f32.gmra.mrb[0].mxu0 %v206
        %v2061 = vpop.f32.mrb[0].mxu0
        %v2062 = vadd.f32 %v1677, %v2061
        %v2063 = vpop.f32.mrb[0].mxu0
        %2064 = vmatprep.mubr.f32.mxu0 %v215
        %2065 = vmatmul.mubr.f32.gmra.mrb[0].mxu0 %v214
        %v2066 = vpop.f32.mrb[0].mxu0
        %v2067 = vadd.f32 %v1682, %v2066
        %v2068 = vpop.f32.mrb[0].mxu0
        %2069 = vmatprep.mubr.f32.mxu0 %v223
        %2070 = vmatmul.mubr.f32.gmra.mrb[0].mxu0 %v222
        %v2071 = vpop.f32.mrb[0].mxu0
        %v2072 = vadd.f32 %v1687, %v2071
        %v2073 = vpop.f32.mrb[0].mxu0
        %2074 = vmatprep.mubr.f32.mxu0 %v231
        %2075 = vmatmul.mubr.f32.gmra.mrb[0].mxu0 %v230
        %v2076 = vpop.f32.mrb[0].mxu0
        %v2077 = vadd.f32 %v1692, %v2076
        %v2078 = vpop.f32.mrb[0].mxu0
        %2079 = vmatprep.mubr.f32.mxu0 %v239
        %2080 = vmatmul.mubr.f32.gmra.mrb[0].mxu0 %v238
        %v2081 = vpop.f32.mrb[0].mxu0
        %v2082 = vadd.f32 %v1697, %v2081
        %v2083 = vpop.f32.mrb[0].mxu0
        %2084 = vmatprep.mubr.f32.mxu0 %v247
        %2085 = vmatmul.mubr.f32.gmra.mrb[0].mxu0 %v246
        %v2086 = vpop.f32.mrb[0].mxu0
        %v2087 = vadd.f32 %v1702, %v2086
        %v2088 = vpop.f32.mrb[0].mxu0
        %2089 = vmatprep.mubr.f32.mxu0 %v255
        %2090 = vmatmul.mubr.f32.gmra.mrb[0].mxu0 %v254
        %v2091 = vpop.f32.mrb[0].mxu0
        %v2092 = vadd.f32 %v1707, %v2091
        %v2093 = vpop.f32.mrb[0].mxu0
        %2094 = vmatprep.mubr.f32.mxu0 %v263
        %2095 = vmatmul.mubr.f32.gmra.mrb[0].mxu0 %v262
        %v2096 = vpop.f32.mrb[0].mxu0
        %v2097 = vadd.f32 %v1712, %v2096
        %v2098 = vpop.f32.mrb[0].mxu0
        %2099 = vmatprep.mubr.f32.mxu0 %v271
        %2100 = vmatmul.mubr.f32.gmra.mrb[0].mxu0 %v270
        %v2101 = vpop.f32.mrb[0].mxu0
        %v2102 = vadd.f32 %v1717, %v2101
        %v2103 = vpop.f32.mrb[0].mxu0
        %2104 = vmatprep.mubr.f32.mxu0 %v279
        %2105 = vmatmul.mubr.f32.gmra.mrb[0].mxu0 %v278
        %v2106 = vpop.f32.mrb[0].mxu0
        %v2107 = vadd.f32 %v1722, %v2106
        %v2108 = vpop.f32.mrb[0].mxu0
        %2109 = vmatprep.mubr.f32.mxu0 %v287
        %2110 = vmatmul.mubr.f32.gmra.mrb[0].mxu0 %v286
        %v2111 = vpop.f32.mrb[0].mxu0
        %v2112 = vadd.f32 %v1727, %v2111
        %v2113 = vpop.f32.mrb[0].mxu0
        %2114 = vmatprep.mubr.f32.mxu0 %v295
        %2115 = vmatmul.mubr.f32.gmra.mrb[0].mxu0 %v294
        %v2116 = vpop.f32.mrb[0].mxu0
        %v2117 = vadd.f32 %v1732, %v2116
        %v2118 = vpop.f32.mrb[0].mxu0
        %2119 = vmatprep.mubr.f32.mxu0 %v303
        %2120 = vmatmul.mubr.f32.gmra.mrb[0].mxu0 %v302
        %v2121 = vpop.f32.mrb[0].mxu0
        %v2122 = vadd.f32 %v1737, %v2121
        %v2123 = vpop.f32.mrb[0].mxu0
        %2124 = vmatprep.mubr.f32.mxu0 %v311
        %2125 = vmatmul.mubr.f32.gmra.mrb[0].mxu0 %v310
        %v2126 = vpop.f32.mrb[0].mxu0
        %v2127 = vadd.f32 %v1742, %v2126
        %v2128 = vpop.f32.mrb[0].mxu0
        %2129 = vmatprep.mubr.f32.mxu0 %v319
        %2130 = vmatmul.mubr.f32.gmra.mrb[0].mxu0 %v318
        %v2131 = vpop.f32.mrb[0].mxu0
        %v2132 = vadd.f32 %v1747, %v2131
        %v2133 = vpop.f32.mrb[0].mxu0
        %2134 = vmatprep.mubr.f32.mxu0 %v327
        %2135 = vmatmul.mubr.f32.gmra.mrb[0].mxu0 %v326
        %v2136 = vpop.f32.mrb[0].mxu0
        %v2137 = vadd.f32 %v1752, %v2136
        %v2138 = vpop.f32.mrb[0].mxu0
        %2139 = vmatprep.mubr.f32.mxu0 %v335
        %2140 = vmatmul.mubr.f32.gmra.mrb[0].mxu0 %v334
        %v2141 = vpop.f32.mrb[0].mxu0
        %v2142 = vadd.f32 %v1757, %v2141
        %v2143 = vpop.f32.mrb[0].mxu0
        %2144 = vmatprep.mubr.f32.mxu0 %v343
        %2145 = vmatmul.mubr.f32.gmra.mrb[0].mxu0 %v342
        %v2146 = vpop.f32.mrb[0].mxu0
        %v2147 = vadd.f32 %v1762, %v2146
        %v2148 = vpop.f32.mrb[0].mxu0
        %2149 = vmatprep.mubr.f32.mxu0 %v351
        %2150 = vmatmul.mubr.f32.gmra.mrb[0].mxu0 %v350
        %v2151 = vpop.f32.mrb[0].mxu0
        %v2152 = vadd.f32 %v1767, %v2151
        %v2153 = vpop.f32.mrb[0].mxu0
        %2154 = vmatprep.mubr.f32.mxu0 %v359
        %2155 = vmatmul.mubr.f32.gmra.mrb[0].mxu0 %v358
        %v2156 = vpop.f32.mrb[0].mxu0
        %v2157 = vadd.f32 %v1772, %v2156
        %v2158 = vpop.f32.mrb[0].mxu0
        %2159 = vmatprep.mubr.f32.mxu0 %v367
        %2160 = vmatmul.mubr.f32.gmra.mrb[0].mxu0 %v366
        %v2161 = vpop.f32.mrb[0].mxu0
        %v2162 = vadd.f32 %v1777, %v2161
        %v2163 = vpop.f32.mrb[0].mxu0
        %2164 = vmatprep.mubr.f32.mxu0 %v375
        %2165 = vmatmul.mubr.f32.gmra.mrb[0].mxu0 %v374
        %v2166 = vpop.f32.mrb[0].mxu0
        %v2167 = vadd.f32 %v1782, %v2166
        %v2168 = vpop.f32.mrb[0].mxu0
        %2169 = vmatprep.mubr.f32.mxu0 %v383
        %2170 = vmatmul.mubr.f32.gmra.mrb[0].mxu0 %v382
        %v2171 = vpop.f32.mrb[0].mxu0
        %v2172 = vadd.f32 %v1787, %v2171
        %v2173 = vpop.f32.mrb[0].mxu0
        %2174 = vmatprep.mubr.f32.mxu0 %v391
        %2175 = vmatmul.mubr.f32.gmra.mrb[0].mxu0 %v390
        %v2176 = vpop.f32.mrb[0].mxu0
        %v2177 = vadd.f32 %v1792, %v2176
        %v2178 = vpop.f32.mrb[0].mxu0
        %2179 = vmatprep.mubr.f32.mxu0 %v399
        %2180 = vmatmul.mubr.f32.gmra.mrb[0].mxu0 %v398
        %v2181 = vpop.f32.mrb[0].mxu0
        %v2182 = vadd.f32 %v1797, %v2181
        %v2183 = vpop.f32.mrb[0].mxu0
        %2184 = vmatprep.mubr.f32.mxu0 %v407
        %2185 = vmatmul.mubr.f32.gmra.mrb[0].mxu0 %v406
        %v2186 = vpop.f32.mrb[0].mxu0
        %v2187 = vadd.f32 %v1802, %v2186
        %v2188 = vpop.f32.mrb[0].mxu0
        %2189 = vmatprep.mubr.f32.mxu0 %v415
        %2190 = vmatmul.mubr.f32.gmra.mrb[0].mxu0 %v414
        %v2191 = vpop.f32.mrb[0].mxu0
        %v2192 = vadd.f32 %v1807, %v2191
        %v2193 = vpop.f32.mrb[0].mxu0
        %2194 = vmatprep.mubr.f32.mxu0 %v423
        %2195 = vmatmul.mubr.f32.gmra.mrb[0].mxu0 %v422
        %v2196 = vpop.f32.mrb[0].mxu0
        %v2197 = vadd.f32 %v1812, %v2196
        %v2198 = vpop.f32.mrb[0].mxu0
        %2199 = vmatprep.mubr.f32.mxu0 %v431
        %2200 = vmatmul.mubr.f32.gmra.mrb[0].mxu0 %v430
        %v2201 = vpop.f32.mrb[0].mxu0
        %v2202 = vadd.f32 %v1817, %v2201
        %v2203 = vpop.f32.mrb[0].mxu0
        %2204 = vmatprep.mubr.f32.mxu0 %v439
        %2205 = vmatmul.mubr.f32.gmra.mrb[0].mxu0 %v438
        %v2206 = vpop.f32.mrb[0].mxu0
        %v2207 = vadd.f32 %v1822, %v2206
        %v2208 = vpop.f32.mrb[0].mxu0
        %2209 = vmatprep.mubr.f32.mxu0 %v447
        %2210 = vmatmul.mubr.f32.gmra.mrb[0].mxu0 %v446
        %v2211 = vpop.f32.mrb[0].mxu0
        %v2212 = vadd.f32 %v1827, %v2211
        %v2213 = vpop.f32.mrb[0].mxu0
        %2214 = vmatprep.mubr.f32.mxu0 %v455
        %2215 = vmatmul.mubr.f32.gmra.mrb[0].mxu0 %v454
        %v2216 = vpop.f32.mrb[0].mxu0
        %v2217 = vadd.f32 %v1832, %v2216
        %v2218 = vpop.f32.mrb[0].mxu0
        %2219 = vmatprep.mubr.f32.mxu0 %v463
        %2220 = vmatmul.mubr.f32.gmra.mrb[0].mxu0 %v462
        %v2221 = vpop.f32.mrb[0].mxu0
        %v2222 = vadd.f32 %v1837, %v2221
        %v2223 = vpop.f32.mrb[0].mxu0
        %2224 = vmatprep.mubr.f32.mxu0 %v471
        %2225 = vmatmul.mubr.f32.gmra.mrb[0].mxu0 %v470
        %v2226 = vpop.f32.mrb[0].mxu0
        %v2227 = vadd.f32 %v1842, %v2226
        %v2228 = vpop.f32.mrb[0].mxu0
        %2229 = vmatprep.mubr.f32.mxu0 %v479
        %2230 = vmatmul.mubr.f32.gmra.mrb[0].mxu0 %v478
        %v2231 = vpop.f32.mrb[0].mxu0
        %v2232 = vadd.f32 %v1847, %v2231
        %v2233 = vpop.f32.mrb[0].mxu0
        %2234 = vmatprep.mubr.f32.mxu0 %v487
        %2235 = vmatmul.mubr.f32.gmra.mrb[0].mxu0 %v486
        %v2236 = vpop.f32.mrb[0].mxu0
        %v2237 = vadd.f32 %v1852, %v2236
        %v2238 = vpop.f32.mrb[0].mxu0
        %2239 = vmatprep.mubr.f32.mxu0 %v495
        %2240 = vmatmul.mubr.f32.gmra.mrb[0].mxu0 %v494
        %v2241 = vpop.f32.mrb[0].mxu0
        %v2242 = vadd.f32 %v1857, %v2241
        %v2243 = vpop.f32.mrb[0].mxu0
        %2244 = vmatprep.mubr.f32.mxu0 %v503
        %2245 = vmatmul.mubr.f32.gmra.mrb[0].mxu0 %v502
        %v2246 = vpop.f32.mrb[0].mxu0
        %v2247 = vadd.f32 %v1862, %v2246
        %v2248 = vpop.f32.mrb[0].mxu0
        %2249 = vmatprep.mubr.f32.mxu0 %v511
        %2250 = vmatmul.mubr.f32.gmra.mrb[0].mxu0 %v510
        %v2251 = vpop.f32.mrb[0].mxu0
        %v2252 = vadd.f32 %v1867, %v2251
        %v2253 = vpop.f32.mrb[0].mxu0
        %2254 = vmatprep.mubr.f32.mxu0 %v519
        %2255 = vmatmul.mubr.f32.gmra.mrb[0].mxu0 %v518
        %v2256 = vpop.f32.mrb[0].mxu0
        %v2257 = vadd.f32 %v1872, %v2256
        %v2258 = vpop.f32.mrb[0].mxu0
        %2259 = vmatprep.mubr.f32.mxu0 %v527
        %2260 = vmatmul.mubr.f32.gmra.mrb[0].mxu0 %v526
        %v2261 = vpop.f32.mrb[0].mxu0
        %v2262 = vadd.f32 %v1877, %v2261
        %v2263 = vpop.f32.mrb[0].mxu0
        %2264 = vmatprep.mubr.f32.mxu0 %v535
        %2265 = vmatmul.mubr.f32.gmra.mrb[0].mxu0 %v534
        %v2266 = vpop.f32.mrb[0].mxu0
        %v2267 = vadd.f32 %v1882, %v2266
        %v2268 = vpop.f32.mrb[0].mxu0
        %2269 = vmatprep.mubr.f32.mxu0 %v543
        %2270 = vmatmul.mubr.f32.gmra.mrb[0].mxu0 %v542
        %v2271 = vpop.f32.mrb[0].mxu0
        %v2272 = vadd.f32 %v1887, %v2271
        %v2273 = vpop.f32.mrb[0].mxu0
        %2274 = vmatprep.mubr.f32.mxu0 %v551
        %2275 = vmatmul.mubr.f32.gmra.mrb[0].mxu0 %v550
        %v2276 = vpop.f32.mrb[0].mxu0
        %v2277 = vadd.f32 %v1892, %v2276
        %v2278 = vpop.f32.mrb[0].mxu0
        %2279 = vmatprep.mubr.f32.mxu0 %v559
        %2280 = vmatmul.mubr.f32.gmra.mrb[0].mxu0 %v558
        %v2281 = vpop.f32.mrb[0].mxu0
        %v2282 = vadd.f32 %v1897, %v2281
        %v2283 = vpop.f32.mrb[0].mxu0
        %2284 = vmatprep.mubr.f32.mxu0 %v567
        %2285 = vmatmul.mubr.f32.gmra.mrb[0].mxu0 %v566
        %v2286 = vpop.f32.mrb[0].mxu0
        %v2287 = vadd.f32 %v1902, %v2286
        %v2288 = vpop.f32.mrb[0].mxu0
        %2289 = vmatprep.mubr.f32.mxu0 %v575
        %2290 = vmatmul.mubr.f32.gmra.mrb[0].mxu0 %v574
        %v2291 = vpop.f32.mrb[0].mxu0
        %v2292 = vadd.f32 %v1907, %v2291
        %v2293 = vpop.f32.mrb[0].mxu0
        %2294 = vmatprep.mubr.f32.mxu0 %v583
        %2295 = vmatmul.mubr.f32.gmra.mrb[0].mxu0 %v582
        %v2296 = vpop.f32.mrb[0].mxu0
        %v2297 = vadd.f32 %v1912, %v2296
        %v2298 = vpop.f32.mrb[0].mxu0
        %2299 = vmatprep.mubr.f32.mxu0 %v591
        %2300 = vmatmul.mubr.f32.gmra.mrb[0].mxu0 %v590
        %v2301 = vpop.f32.mrb[0].mxu0
        %v2302 = vadd.f32 %v1917, %v2301
        %v2303 = vpop.f32.mrb[0].mxu0
        %2304 = vmatprep.mubr.f32.mxu0 %v599
        %2305 = vmatmul.mubr.f32.gmra.mrb[0].mxu0 %v598
        %v2306 = vpop.f32.mrb[0].mxu0
        %v2307 = vadd.f32 %v1922, %v2306
        %v2308 = vpop.f32.mrb[0].mxu0
        %2309 = vmatprep.mubr.f32.mxu0 %v607
        %2310 = vmatmul.mubr.f32.gmra.mrb[0].mxu0 %v606
        %v2311 = vpop.f32.mrb[0].mxu0
        %v2312 = vadd.f32 %v1927, %v2311
        %v2313 = vpop.f32.mrb[0].mxu0
        %2314 = vmatprep.mubr.f32.mxu0 %v615
        %2315 = vmatmul.mubr.f32.gmra.mrb[0].mxu0 %v614
        %v2316 = vpop.f32.mrb[0].mxu0
        %v2317 = vadd.f32 %v1932, %v2316
        %v2318 = vpop.f32.mrb[0].mxu0
        %2319 = vmatprep.mubr.f32.mxu0 %v623
        %2320 = vmatmul.mubr.f32.gmra.mrb[0].mxu0 %v622
        %v2321 = vpop.f32.mrb[0].mxu0
        %v2322 = vadd.f32 %v1937, %v2321
        %v2323 = vpop.f32.mrb[0].mxu0
        %2324 = vmatprep.mubr.f32.mxu0 %v631
        %2325 = vmatmul.mubr.f32.gmra.mrb[0].mxu0 %v630
        %v2326 = vpop.f32.mrb[0].mxu0
        %v2327 = vadd.f32 %v1942, %v2326
        %v2328 = vpop.f32.mrb[0].mxu0
        %2329 = vmatprep.mubr.f32.mxu0 %v639
        %2330 = vmatmul.mubr.f32.gmra.mrb[0].mxu0 %v638
        %v2331 = vpop.f32.mrb[0].mxu0
        %v2332 = vadd.f32 %v1947, %v2331
        %v2333 = vpop.f32.mrb[0].mxu0
        %2334 = vmatprep.mubr.f32.mxu0 %v647
        %2335 = vmatmul.mubr.f32.gmra.mrb[0].mxu0 %v646
        %v2336 = vpop.f32.mrb[0].mxu0
        %v2337 = vadd.f32 %v1952, %v2336
        %v2338 = vpop.f32.mrb[0].mxu0
        %2339 = vmatprep.mubr.f32.mxu0 %v655
        %2340 = vmatmul.mubr.f32.gmra.mrb[0].mxu0 %v654
        %v2341 = vpop.f32.mrb[0].mxu0
        %v2342 = vadd.f32 %v1957, %v2341
        %v2343 = vpop.f32.mrb[0].mxu0
        %2344 = vmatprep.mubr.f32.mxu0 %v663
        %2345 = vmatmul.mubr.f32.gmra.mrb[0].mxu0 %v662
        %v2346 = vpop.f32.mrb[0].mxu0
        %v2347 = vadd.f32 %v1962, %v2346
        %v2348 = vpop.f32.mrb[0].mxu0
        %2349 = vmatprep.mubr.f32.mxu0 %v671
        %2350 = vmatmul.mubr.f32.gmra.mrb[0].mxu0 %v670
        %v2351 = vpop.f32.mrb[0].mxu0
        %v2352 = vadd.f32 %v1967, %v2351
        %v2353 = vpop.f32.mrb[0].mxu0
        %2354 = vmatprep.mubr.f32.mxu0 %v679
        %2355 = vmatmul.mubr.f32.gmra.mrb[0].mxu0 %v678
        %v2356 = vpop.f32.mrb[0].mxu0
        %v2357 = vadd.f32 %v1972, %v2356
        %v2358 = vpop.f32.mrb[0].mxu0
        %2359 = vmatprep.mubr.f32.mxu0 %v687
        %2360 = vmatmul.mubr.f32.gmra.mrb[0].mxu0 %v686
        %v2361 = vpop.f32.mrb[0].mxu0
        %v2362 = vadd.f32 %v1977, %v2361
        %v2363 = vpop.f32.mrb[0].mxu0
        %2364 = vmatprep.mubr.f32.mxu0 %v695
        %2365 = vmatmul.mubr.f32.gmra.mrb[0].mxu0 %v694
        %v2366 = vpop.f32.mrb[0].mxu0
        %v2367 = vadd.f32 %v1982, %v2366
        %v2368 = vpop.f32.mrb[0].mxu0
        %2369 = vmatprep.mubr.f32.mxu0 %v703
        %2370 = vmatmul.mubr.f32.gmra.mrb[0].mxu0 %v702
        %v2371 = vpop.f32.mrb[0].mxu0
        %v2372 = vadd.f32 %v1987, %v2371
        %v2373 = vpop.f32.mrb[0].mxu0
        %2374 = vmatprep.mubr.f32.mxu0 %v711
        %2375 = vmatmul.mubr.f32.gmra.mrb[0].mxu0 %v710
        %v2376 = vpop.f32.mrb[0].mxu0
        %v2377 = vadd.f32 %v1992, %v2376
        %v2378 = vpop.f32.mrb[0].mxu0
        %2379 = vdwg.mxu0
        %v2380 = vmul.f32 %v2062, %v2062
        %v2381 = vmul.f32 %v2067, %v2067
        %v2382 = vmul.f32 %v2072, %v2072
        %v2383 = vmul.f32 %v2077, %v2077
        %v2384 = vmul.f32 %v2082, %v2082
        %v2385 = vmul.f32 %v2087, %v2087
        %v2386 = vmul.f32 %v2092, %v2092
        %v2387 = vmul.f32 %v2097, %v2097
        %v2388 = vmul.f32 %v2102, %v2102
        %v2389 = vmul.f32 %v2107, %v2107
        %v2390 = vmul.f32 %v2112, %v2112
        %v2391 = vmul.f32 %v2117, %v2117
        %v2392 = vmul.f32 %v2122, %v2122
        %v2393 = vmul.f32 %v2127, %v2127
        %v2394 = vmul.f32 %v2132, %v2132
        %v2395 = vmul.f32 %v2137, %v2137
        %v2396 = vmul.f32 %v2142, %v2142
        %v2397 = vmul.f32 %v2147, %v2147
        %v2398 = vmul.f32 %v2152, %v2152
        %v2399 = vmul.f32 %v2157, %v2157
        %v2400 = vmul.f32 %v2162, %v2162
        %v2401 = vmul.f32 %v2167, %v2167
        %v2402 = vmul.f32 %v2172, %v2172
        %v2403 = vmul.f32 %v2177, %v2177
        %v2404 = vmul.f32 %v2182, %v2182
        %v2405 = vmul.f32 %v2187, %v2187
        %v2406 = vmul.f32 %v2192, %v2192
        %v2407 = vmul.f32 %v2197, %v2197
        %v2408 = vmul.f32 %v2202, %v2202
        %v2409 = vmul.f32 %v2207, %v2207
        %v2410 = vmul.f32 %v2212, %v2212
        %v2411 = vmul.f32 %v2217, %v2217
        %v2412 = vmul.f32 %v2222, %v2222
        %v2413 = vmul.f32 %v2227, %v2227
        %v2414 = vmul.f32 %v2232, %v2232
        %v2415 = vmul.f32 %v2237, %v2237
        %v2416 = vmul.f32 %v2242, %v2242
        %v2417 = vmul.f32 %v2247, %v2247
        %v2418 = vmul.f32 %v2252, %v2252
        %v2419 = vmul.f32 %v2257, %v2257
        %v2420 = vmul.f32 %v2262, %v2262
        %v2421 = vmul.f32 %v2267, %v2267
        %v2422 = vmul.f32 %v2272, %v2272
        %v2423 = vmul.f32 %v2277, %v2277
        %v2424 = vmul.f32 %v2282, %v2282
        %v2425 = vmul.f32 %v2287, %v2287
        %v2426 = vmul.f32 %v2292, %v2292
        %v2427 = vmul.f32 %v2297, %v2297
        %v2428 = vmul.f32 %v2302, %v2302
        %v2429 = vmul.f32 %v2307, %v2307
        %v2430 = vmul.f32 %v2312, %v2312
        %v2431 = vmul.f32 %v2317, %v2317
        %v2432 = vmul.f32 %v2322, %v2322
        %v2433 = vmul.f32 %v2327, %v2327
        %v2434 = vmul.f32 %v2332, %v2332
        %v2435 = vmul.f32 %v2337, %v2337
        %v2436 = vmul.f32 %v2342, %v2342
        %v2437 = vmul.f32 %v2347, %v2347
        %v2438 = vmul.f32 %v2352, %v2352
        %v2439 = vmul.f32 %v2357, %v2357
        %v2440 = vmul.f32 %v2362, %v2362
        %v2441 = vmul.f32 %v2367, %v2367
        %v2442 = vmul.f32 %v2372, %v2372
        %v2443 = vmul.f32 %v2377, %v2377
        %v2444 = vld [vmem:[#allocation2] sm:$0xff]
        %v2445 = vadd.f32 %v2380, %v2381
        %v2446 = vadd.f32 %v2445, %v2382
        %v2447 = vadd.f32 %v2446, %v2383
        %v2448 = vadd.f32 %v2447, %v2384
        %v2449 = vadd.f32 %v2448, %v2385
        %v2450 = vadd.f32 %v2449, %v2386
        %v2451 = vadd.f32 %v2450, %v2387
        %v2452 = vadd.f32 %v2451, %v2388
        %v2453 = vadd.f32 %v2452, %v2389
        %v2454 = vadd.f32 %v2453, %v2390
        %v2455 = vadd.f32 %v2454, %v2391
        %v2456 = vadd.f32 %v2455, %v2392
        %v2457 = vadd.f32 %v2456, %v2393
        %v2458 = vadd.f32 %v2457, %v2394
        %v2459 = vadd.f32 %v2458, %v2395
        %v2460 = vadd.f32 %v2459, %v2396
        %v2461 = vadd.f32 %v2460, %v2397
        %v2462 = vadd.f32 %v2461, %v2398
        %v2463 = vadd.f32 %v2462, %v2399
        %v2464 = vadd.f32 %v2463, %v2400
        %v2465 = vadd.f32 %v2464, %v2401
        %v2466 = vadd.f32 %v2465, %v2402
        %v2467 = vadd.f32 %v2466, %v2403
        %v2468 = vadd.f32 %v2467, %v2404
        %v2469 = vadd.f32 %v2468, %v2405
        %v2470 = vadd.f32 %v2469, %v2406
        %v2471 = vadd.f32 %v2470, %v2407
        %v2472 = vadd.f32 %v2471, %v2408
        %v2473 = vadd.f32 %v2472, %v2409
        %v2474 = vadd.f32 %v2473, %v2410
        %v2475 = vadd.f32 %v2474, %v2411
        %v2476 = vadd.f32 %v2475, %v2412
        %v2477 = vadd.f32 %v2476, %v2413
        %v2478 = vadd.f32 %v2477, %v2414
        %v2479 = vadd.f32 %v2478, %v2415
        %v2480 = vadd.f32 %v2479, %v2416
        %v2481 = vadd.f32 %v2480, %v2417
        %v2482 = vadd.f32 %v2481, %v2418
        %v2483 = vadd.f32 %v2482, %v2419
        %v2484 = vadd.f32 %v2483, %v2420
        %v2485 = vadd.f32 %v2484, %v2421
        %v2486 = vadd.f32 %v2485, %v2422
        %v2487 = vadd.f32 %v2486, %v2423
        %v2488 = vadd.f32 %v2487, %v2424
        %v2489 = vadd.f32 %v2488, %v2425
        %v2490 = vadd.f32 %v2489, %v2426
        %v2491 = vadd.f32 %v2490, %v2427
        %v2492 = vadd.f32 %v2491, %v2428
        %v2493 = vadd.f32 %v2492, %v2429
        %v2494 = vadd.f32 %v2493, %v2430
        %v2495 = vadd.f32 %v2494, %v2431
        %v2496 = vadd.f32 %v2495, %v2432
        %v2497 = vadd.f32 %v2496, %v2433
        %v2498 = vadd.f32 %v2497, %v2434
        %v2499 = vadd.f32 %v2498, %v2435
        %v2500 = vadd.f32 %v2499, %v2436
        %v2501 = vadd.f32 %v2500, %v2437
        %v2502 = vadd.f32 %v2501, %v2438
        %v2503 = vadd.f32 %v2502, %v2439
        %v2504 = vadd.f32 %v2503, %v2440
        %v2505 = vadd.f32 %v2504, %v2441
        %v2506 = vadd.f32 %v2505, %v2442
        %v2507 = vadd.f32 %v2506, %v2443
        %v2508 = vadd.f32 %v2444, %v2507
        %2509 = vst [vmem:[#allocation2] sm:$0xff] %v2508
        // Predicated region
        $region41: #{tpu_custom_call.1} parent=27 // pred_check
          %p2510 = pneg %p195
        $region42: #{tpu_custom_call.1} parent=27 // pred_check_branch
          %2512 = sbr.rel (%p2510) target = $region44
        $region43: #{tpu_custom_call.1} parent=27 // pred_region
          %v2513 = vld [vmem:[#allocation2] sm:$0xff]
          %2514 = vst [vmem:[%s192] sm:$0xff] %v2513
        $region44: #{tpu_custom_call.1} parent=27 // pred_fallthru
          _
        %s2515 = sand.u32 %s89, 1
        %s2516 = scalar_lea.sflag [#allocation5], %s2515
        %s2517 = sand.u32 %s89, 1
        %s2518 = smul.addr %s2517, 8
        %s2519 = scalar_lea.vmem [#allocation8], %s2518
        // Predicated region
        $region45: #{tpu_custom_call.1} parent=27 // pred_check
          %p2520 = pneg %p99
        $region46: #{tpu_custom_call.1} parent=27 // pred_check_branch
          %2522 = sbr.rel (%p2520) target = $region48
        $region47: #{tpu_custom_call.1} parent=27 // pred_region
          %s2524 = ssub.s32 128, 128
          %2525 = vsyncadd %s2516, %s2524
          %s2526 = smul.addr %s24, 128
          %s2527 = scalar_lea.hbm %s2, %s2526
          %s2529 = sshll.u32 %s2519, 4
          %s2530 = int_to_ptr.vmem [resolvable:$true] %s2529
          %2532 = dma.vmem_to_hbm [thread:$0]  %s2530, 128, %s2527, %s2516
        $region48: #{tpu_custom_call.1} parent=27 // pred_fallthru
          _
      $region28: #{tpu_custom_call.1} parent=5 // pred_fallthru
        _
      %p2533 = scmp.le.s32.totalorder 2, %s15
      // Predicated region
      $region49: #{tpu_custom_call.1} parent=5 // pred_check
        %p2534 = pneg %p2533
      $region50: #{tpu_custom_call.1} parent=5 // pred_check_branch
        %2536 = sbr.rel (%p2534) target = $region52
      $region51: #{tpu_custom_call.1} parent=5 // pred_region
        %s2537 = ssub.s32 %s15, 2
        // Predicated region
        $region53: #{tpu_custom_call.1} parent=51 // pred_check
          %p2538 = pneg %p105
        $region54: #{tpu_custom_call.1} parent=51 // pred_check_branch
          %2540 = sbr.rel (%p2538) target = $region56
        $region55: #{tpu_custom_call.1} parent=51 // pred_region
          %s2541 = sand.u32 %s90, 1
          %s2542 = scalar_lea.sflag [#allocation5], %s2541
          %s2543 = sand.u32 %s90, 1
          %s2544 = smul.addr %s2543, 8
          %s2545 = scalar_lea.vmem [#allocation8], %s2544
          %2546 = dma.done %s2542, 128
        $region56: #{tpu_custom_call.1} parent=51 // pred_fallthru
          _
      $region52: #{tpu_custom_call.1} parent=5 // pred_fallthru
        _
    $region6: #{tpu_custom_call.1} parent=1 // loop_footer
      %s19 = sadd.s32 1, %s15
    $region7: #{tpu_custom_call.1} parent=1 // loop_footer_branch
      %14 = sbr.rel target = $region3
    $region8: #{tpu_custom_call.1} parent=1 // loop_exit
      _
    %2547 = vsyncpa [#allocation4], 1
    %s2548 = scalar_lea.sflag [#allocation4], 1
    %2549 = vsyncpa %s2548, 1
    %2550 = vsyncpa [#allocation7], 1
    %2551 = vsyncpa [#allocation5], 1
    %s2552 = scalar_lea.sflag [#allocation5], 1
    %2553 = vsyncpa %s2552, 1

</llo_original>
